<compile_context>
chip_gen: v6e
topology: v6e:2x2x1
jax: 0.10.0
libtpu: 0.0.40
codegen_flags: <defaults>
</compile_context>

<pallas_src>
import jax
import jax.numpy as jnp
from jax.experimental import pallas as pl
from jax.experimental.pallas import tpu as pltpu


# ----------------------------- static configuration ----------------------------- #
B = 2              # batch per view
CIN = 4            # input channels
H = W = 16         # spatial size
COUT = 8           # backbone conv output channels
HID = 32           # neck / predictor hidden width
PROJ = 16          # projection dim
PAD = 128          # lane padding applied to every feature dim
KPAD = 128         # lane padding of the im2col contraction dim (9*CIN=36 -> 128)

B2 = 2 * B                     # both views batched together
NROW = B2 * H * W              # im2col rows (valid conv output positions only)


# --------------------------------- fused kernel --------------------------------- #

def _fused_forward_kernel(patch_ref, cw_ref, cb_ref, pool_ref, mw_ref, mb_ref, o_ref):
    """Whole SSModel forward for both views in one kernel.

    patch_ref : [NROW, KPAD]   bf16 im2col patches (9 taps x CIN, zero lane-padded)
    cw_ref    : [KPAD, PAD]    bf16 conv taps, row (kh*3+kw)*CIN + c (rest zero)
    cb_ref    : [1, PAD]       f32  conv bias (lane-padded)
    pool_ref  : [B2, NROW]     bf16 GAP matrix (1/(H*W) on each image's rows)
    mw_ref    : [4*PAD, PAD]   bf16 stacked MLP weights (neck_w1, neck_w2, pred_w1, pred_w2)
    mb_ref    : [4, PAD]       f32  stacked MLP biases
    o_ref     : [1, 1]         f32  scalar loss
    """
    # ---- backbone: 3x3 conv (pad=1) as ONE im2col matmul, bias + ReLU ----
    acc = jnp.dot(patch_ref[...], cw_ref[...],
                  preferred_element_type=jnp.float32)                   # [NROW, PAD] f32
    y = jnp.maximum(acc + cb_ref[...], 0.0).astype(jnp.bfloat16)        # ReLU, keep bf16

    # ---- global average pool, fused as one bf16 matmul with the pooling matrix ----
    feats = jnp.dot(pool_ref[...], y,
                    preferred_element_type=jnp.float32)                 # [B2, PAD] f32

    # ---- neck (fc -> ReLU -> fc) and head predictor (fc -> ReLU -> fc) ----
    def fc(v, layer):
        w = mw_ref[layer * PAD:(layer + 1) * PAD, :]                    # static slice, bf16
        return (jnp.dot(v.astype(jnp.bfloat16), w, preferred_element_type=jnp.float32)
                + mb_ref[layer:layer + 1, :])

    h = jnp.maximum(fc(feats, 0), 0.0)
    z = fc(h, 1)                                                        # projections [B2, PAD]
    hp = jnp.maximum(fc(z, 2), 0.0)
    p = fc(hp, 3)                                                       # predictions [B2, PAD]

    p1, p2 = p[0:B, :], p[B:B2, :]
    z1, z2 = z[0:B, :], z[B:B2, :]
    # NOTE: stop-gradient on the target projections only affects the backward pass; the forward
    # value is identical, so it is omitted inside this forward-only kernel.

    def pair_loss(pred, tgt):
        pn2 = jnp.maximum(jnp.sum(pred * pred, axis=-1, keepdims=True), 1e-12)
        tn2 = jnp.maximum(jnp.sum(tgt * tgt, axis=-1, keepdims=True), 1e-12)
        cos = (jnp.sum(pred * tgt, axis=-1, keepdims=True)
               * jax.lax.rsqrt(pn2) * jax.lax.rsqrt(tn2))               # [B, 1]
        return jnp.mean(2.0 - 2.0 * cos)

    # TODO(synk): symmetric-term combination (mean of the two pairs) is the synthetic head's
    # convention; the actual registry head cfg may sum the two terms instead.
    loss = 0.5 * (pair_loss(p1, z2) + pair_loss(p2, z1))
    o_ref[...] = jnp.reshape(loss, (1, 1)).astype(o_ref.dtype)


# ------------------------------ wrapper / packing -------------------------------- #

def pack_params(params):
    """One-time packing of PyTorch-layout params into lane-dense (128-wide) kernel operands.

    Hoisted out of the per-call jitted forward so it is not re-emitted as per-step XLA ops.
    """
    # conv weight [Cout, Cin, kh, kw] -> [(kh*3+kw)*Cin + c, Cout], zero-padded, bf16.
    cw = jnp.transpose(params["conv_w"], (2, 3, 1, 0)).reshape(9 * CIN, COUT)
    cw = jnp.pad(cw, ((0, KPAD - 9 * CIN), (0, PAD - COUT))).astype(jnp.bfloat16)
    cb = jnp.pad(params["conv_b"].reshape(1, COUT),
                 ((0, 0), (0, PAD - COUT))).astype(jnp.float32)

    def pad_w(w):
        i, o = w.shape
        return jnp.pad(w, ((0, PAD - i), (0, PAD - o)))

    def pad_b(b):
        return jnp.pad(b, (0, PAD - b.shape[0]))

    mw = jnp.concatenate([pad_w(params["neck_w1"]), pad_w(params["neck_w2"]),
                          pad_w(params["pred_w1"]), pad_w(params["pred_w2"])],
                         axis=0).astype(jnp.bfloat16)                    # [4*PAD, PAD]
    mb = jnp.stack([pad_b(params["neck_b1"]), pad_b(params["neck_b2"]),
                    pad_b(params["pred_b1"]), pad_b(params["pred_b2"])],
                   axis=0).astype(jnp.float32)                           # [4, PAD]

    # GAP matrix: per-image mean over its contiguous block of NROW/B2 rows (1/256 exact in bf16).
    r = jnp.arange(NROW)
    pool = ((r[None, :] // (H * W)) == jnp.arange(B2)[:, None]).astype(jnp.float32)
    pool = (pool / float(H * W)).astype(jnp.bfloat16)                    # [B2, NROW]

    return {"cw": cw, "cb": cb, "pool": pool, "mw": mw, "mb": mb}


_VMEM = pl.BlockSpec(memory_space=pltpu.MemorySpace.VMEM)


@jax.jit
def ssmodel_forward(packed, x1, x2):
    """Mirrors SSModel.forward(x1, x2): shared backbone+neck on both views, head loss."""
    # Batch the two views so the shared backbone/neck run once.
    x = jnp.concatenate([x1, x2], axis=0)                 # [2B, C, H, W]
    x = jnp.transpose(x, (0, 2, 3, 1))                    # NCHW -> NHWC
    xp = jnp.pad(x, ((0, 0), (1, 1), (1, 1), (0, 0)))     # conv pad=1 -> [2B, H+2, W+2, C]

    # im2col-lite: gather the 9 taps into the lane dimension (one lane-dense bf16 operand).
    taps = [xp[:, kh:kh + H, kw:kw + W, :] for kh in range(3) for kw in range(3)]
    patches = jnp.concatenate(taps, axis=-1).reshape(NROW, 9 * CIN)     # [NROW, 36]
    patches = jnp.pad(patches, ((0, 0), (0, KPAD - 9 * CIN))).astype(jnp.bfloat16)

    loss = pl.pallas_call(
        _fused_forward_kernel,
        out_shape=jax.ShapeDtypeStruct((1, 1), jnp.float32),
        in_specs=[_VMEM] * 6,
        out_specs=_VMEM,
        compiler_params=pltpu.CompilerParams(vmem_limit_bytes=32 * 1024 * 1024),
    )(patches, packed["cw"], packed["cb"], packed["pool"], packed["mw"], packed["mb"])
    return {"loss": loss[0, 0]}


# ---------------------------------- param init ----------------------------------- #

def init_params(key):
    ks = jax.random.split(key, 5)
    return {
        # backbone (PyTorch conv layout)
        "conv_w":  0.1 * jax.random.normal(ks[0], (COUT, CIN, 3, 3), jnp.float32),
        "conv_b":  jnp.zeros((COUT,), jnp.float32),
        # neck: fc -> ReLU -> fc (weights stored [in, out])
        "neck_w1": 0.1 * jax.random.normal(ks[1], (COUT, HID), jnp.float32),
        "neck_b1": jnp.zeros((HID,), jnp.float32),
        "neck_w2": 0.1 * jax.random.normal(ks[2], (HID, PROJ), jnp.float32),
        "neck_b2": jnp.zeros((PROJ,), jnp.float32),
        # head predictor: fc -> ReLU -> fc
        "pred_w1": 0.1 * jax.random.normal(ks[3], (PROJ, HID), jnp.float32),
        "pred_b1": jnp.zeros((HID,), jnp.float32),
        "pred_w2": 0.1 * jax.random.normal(ks[4], (HID, PROJ), jnp.float32),
        "pred_b2": jnp.zeros((PROJ,), jnp.float32),
    }


# ------------------------------------- main --------------------------------------- #

if __name__ == "__main__":
    key = jax.random.PRNGKey(0)
    kp, k1, k2 = jax.random.split(key, 3)

    params = init_params(kp)
    packed = jax.tree_util.tree_map(jax.block_until_ready, pack_params(params))  # pack once
    x1 = jax.random.normal(k1, (B, CIN, H, W), jnp.float32)   # NCHW, like PyTorch
    x2 = jax.random.normal(k2, (B, CIN, H, W), jnp.float32)

    out = ssmodel_forward(packed, x1, x2)
    loss = jax.block_until_ready(out["loss"])
    assert loss.shape == ()
    assert bool(jnp.isfinite(loss))
    print("KERNEL_OK")
</pallas_src>

<mosaic_0001>
module attributes {stable_mosaic.version = 11 : i64} {
  func.func @_fused_forward_kernel(%arg0: memref<1024x128xbf16, #tpu.memory_space<vmem>>, %arg1: memref<128x128xbf16, #tpu.memory_space<vmem>>, %arg2: memref<1x128xf32, #tpu.memory_space<vmem>>, %arg3: memref<4x1024xbf16, #tpu.memory_space<vmem>>, %arg4: memref<512x128xbf16, #tpu.memory_space<vmem>>, %arg5: memref<4x128xf32, #tpu.memory_space<vmem>>, %arg6: memref<1x1xf32, #tpu.memory_space<vmem>>) attributes {dimension_semantics = [], scalar_prefetch = 0 : i64, scratch_operands = 0 : i64, tpu.core_type = #tpu.core_type<tc>} {
    %c0 = arith.constant 0 : index
    %c0_0 = arith.constant 0 : index
    %0 = vector.load %arg0[%c0, %c0_0] : memref<1024x128xbf16, #tpu.memory_space<vmem>>, vector<1024x128xbf16>
    %c0_1 = arith.constant 0 : index
    %c0_2 = arith.constant 0 : index
    %1 = vector.load %arg1[%c0_1, %c0_2] : memref<128x128xbf16, #tpu.memory_space<vmem>>, vector<128x128xbf16>
    %cst = arith.constant dense<0.000000e+00> : vector<1024x128xf32>
    %2 = tpu.matmul %0, %1, %cst {dimension_numbers = #tpu.dot_dimension_numbers<[1], [0], [0], [1], [0, 0, 1, 1], [], []>} : vector<1024x128xbf16>, vector<128x128xbf16>, vector<1024x128xf32> -> vector<1024x128xf32>
    %c0_3 = arith.constant 0 : index
    %c0_4 = arith.constant 0 : index
    %3 = vector.load %arg2[%c0_3, %c0_4] : memref<1x128xf32, #tpu.memory_space<vmem>>, vector<1x128xf32>
    %4 = vector.broadcast %3 : vector<1x128xf32> to vector<1024x128xf32>
    %5 = arith.addf %2, %4 : vector<1024x128xf32>
    %cst_5 = arith.constant 0.000000e+00 : f32
    %6 = vector.broadcast %cst_5 : f32 to vector<1024x128xf32>
    %7 = arith.maximumf %5, %6 : vector<1024x128xf32>
    %8 = arith.truncf %7 : vector<1024x128xf32> to vector<1024x128xbf16>
    %c0_6 = arith.constant 0 : index
    %c0_7 = arith.constant 0 : index
    %9 = vector.load %arg3[%c0_6, %c0_7] : memref<4x1024xbf16, #tpu.memory_space<vmem>>, vector<4x1024xbf16>
    %cst_8 = arith.constant dense<0.000000e+00> : vector<4x128xf32>
    %10 = tpu.matmul %9, %8, %cst_8 {dimension_numbers = #tpu.dot_dimension_numbers<[1], [0], [0], [1], [0, 0, 1, 1], [], []>} : vector<4x1024xbf16>, vector<1024x128xbf16>, vector<4x128xf32> -> vector<4x128xf32>
    %c0_9 = arith.constant 0 : index
    %c0_10 = arith.constant 0 : index
    %11 = vector.load %arg4[%c0_9, %c0_10] : memref<512x128xbf16, #tpu.memory_space<vmem>>, vector<128x128xbf16>
    %12 = arith.truncf %10 : vector<4x128xf32> to vector<4x128xbf16>
    %cst_11 = arith.constant dense<0.000000e+00> : vector<4x128xf32>
    %13 = tpu.matmul %12, %11, %cst_11 {dimension_numbers = #tpu.dot_dimension_numbers<[1], [0], [0], [1], [0, 0, 1, 1], [], []>} : vector<4x128xbf16>, vector<128x128xbf16>, vector<4x128xf32> -> vector<4x128xf32>
    %c0_12 = arith.constant 0 : index
    %c0_13 = arith.constant 0 : index
    %14 = vector.load %arg5[%c0_12, %c0_13] : memref<4x128xf32, #tpu.memory_space<vmem>>, vector<1x128xf32>
    %15 = vector.broadcast %14 : vector<1x128xf32> to vector<4x128xf32>
    %16 = arith.addf %13, %15 : vector<4x128xf32>
    %cst_14 = arith.constant 0.000000e+00 : f32
    %17 = vector.broadcast %cst_14 : f32 to vector<4x128xf32>
    %18 = arith.maximumf %16, %17 : vector<4x128xf32>
    %c128 = arith.constant 128 : index
    %c0_15 = arith.constant 0 : index
    %19 = vector.load %arg4[%c128, %c0_15] : memref<512x128xbf16, #tpu.memory_space<vmem>>, vector<128x128xbf16>
    %20 = arith.truncf %18 : vector<4x128xf32> to vector<4x128xbf16>
    %cst_16 = arith.constant dense<0.000000e+00> : vector<4x128xf32>
    %21 = tpu.matmul %20, %19, %cst_16 {dimension_numbers = #tpu.dot_dimension_numbers<[1], [0], [0], [1], [0, 0, 1, 1], [], []>} : vector<4x128xbf16>, vector<128x128xbf16>, vector<4x128xf32> -> vector<4x128xf32>
    %c1 = arith.constant 1 : index
    %c0_17 = arith.constant 0 : index
    %22 = vector.load %arg5[%c1, %c0_17] : memref<4x128xf32, #tpu.memory_space<vmem>>, vector<1x128xf32>
    %23 = vector.broadcast %22 : vector<1x128xf32> to vector<4x128xf32>
    %24 = arith.addf %21, %23 : vector<4x128xf32>
    %c256 = arith.constant 256 : index
    %c0_18 = arith.constant 0 : index
    %25 = vector.load %arg4[%c256, %c0_18] : memref<512x128xbf16, #tpu.memory_space<vmem>>, vector<128x128xbf16>
    %26 = arith.truncf %24 : vector<4x128xf32> to vector<4x128xbf16>
    %cst_19 = arith.constant dense<0.000000e+00> : vector<4x128xf32>
    %27 = tpu.matmul %26, %25, %cst_19 {dimension_numbers = #tpu.dot_dimension_numbers<[1], [0], [0], [1], [0, 0, 1, 1], [], []>} : vector<4x128xbf16>, vector<128x128xbf16>, vector<4x128xf32> -> vector<4x128xf32>
    %c2 = arith.constant 2 : index
    %c0_20 = arith.constant 0 : index
    %28 = vector.load %arg5[%c2, %c0_20] : memref<4x128xf32, #tpu.memory_space<vmem>>, vector<1x128xf32>
    %29 = vector.broadcast %28 : vector<1x128xf32> to vector<4x128xf32>
    %30 = arith.addf %27, %29 : vector<4x128xf32>
    %cst_21 = arith.constant 0.000000e+00 : f32
    %31 = vector.broadcast %cst_21 : f32 to vector<4x128xf32>
    %32 = arith.maximumf %30, %31 : vector<4x128xf32>
    %c384 = arith.constant 384 : index
    %c0_22 = arith.constant 0 : index
    %33 = vector.load %arg4[%c384, %c0_22] : memref<512x128xbf16, #tpu.memory_space<vmem>>, vector<128x128xbf16>
    %34 = arith.truncf %32 : vector<4x128xf32> to vector<4x128xbf16>
    %cst_23 = arith.constant dense<0.000000e+00> : vector<4x128xf32>
    %35 = tpu.matmul %34, %33, %cst_23 {dimension_numbers = #tpu.dot_dimension_numbers<[1], [0], [0], [1], [0, 0, 1, 1], [], []>} : vector<4x128xbf16>, vector<128x128xbf16>, vector<4x128xf32> -> vector<4x128xf32>
    %c3 = arith.constant 3 : index
    %c0_24 = arith.constant 0 : index
    %36 = vector.load %arg5[%c3, %c0_24] : memref<4x128xf32, #tpu.memory_space<vmem>>, vector<1x128xf32>
    %37 = vector.broadcast %36 : vector<1x128xf32> to vector<4x128xf32>
    %38 = arith.addf %35, %37 : vector<4x128xf32>
    %39 = vector.extract_strided_slice %38 {offsets = [0, 0], sizes = [2, 128], strides = [1, 1]} : vector<4x128xf32> to vector<2x128xf32>
    %40 = vector.extract_strided_slice %38 {offsets = [2, 0], sizes = [2, 128], strides = [1, 1]} : vector<4x128xf32> to vector<2x128xf32>
    %41 = vector.extract_strided_slice %24 {offsets = [0, 0], sizes = [2, 128], strides = [1, 1]} : vector<4x128xf32> to vector<2x128xf32>
    %42 = vector.extract_strided_slice %24 {offsets = [2, 0], sizes = [2, 128], strides = [1, 1]} : vector<4x128xf32> to vector<2x128xf32>
    %43 = arith.mulf %39, %39 : vector<2x128xf32>
    %cst_25 = arith.constant dense<0.000000e+00> : vector<2xf32>
    %44 = vector.multi_reduction <add>, %43, %cst_25 [1] : vector<2x128xf32> to vector<2xf32>
    %45 = vector.shape_cast %44 : vector<2xf32> to vector<2x1xf32>
    %cst_26 = arith.constant 9.99999996E-13 : f32
    %46 = vector.broadcast %cst_26 : f32 to vector<2x1xf32>
    %47 = arith.maximumf %45, %46 : vector<2x1xf32>
    %48 = arith.mulf %42, %42 : vector<2x128xf32>
    %cst_27 = arith.constant dense<0.000000e+00> : vector<2xf32>
    %49 = vector.multi_reduction <add>, %48, %cst_27 [1] : vector<2x128xf32> to vector<2xf32>
    %50 = vector.shape_cast %49 : vector<2xf32> to vector<2x1xf32>
    %cst_28 = arith.constant 9.99999996E-13 : f32
    %51 = vector.broadcast %cst_28 : f32 to vector<2x1xf32>
    %52 = arith.maximumf %50, %51 : vector<2x1xf32>
    %53 = arith.mulf %39, %42 : vector<2x128xf32>
    %cst_29 = arith.constant dense<0.000000e+00> : vector<2xf32>
    %54 = vector.multi_reduction <add>, %53, %cst_29 [1] : vector<2x128xf32> to vector<2xf32>
    %55 = vector.shape_cast %54 : vector<2xf32> to vector<2x1xf32>
    %56 = math.rsqrt %47 : vector<2x1xf32>
    %57 = arith.mulf %55, %56 : vector<2x1xf32>
    %58 = math.rsqrt %52 : vector<2x1xf32>
    %59 = arith.mulf %57, %58 : vector<2x1xf32>
    %cst_30 = arith.constant 2.000000e+00 : f32
    %60 = vector.broadcast %cst_30 : f32 to vector<2x1xf32>
    %61 = arith.mulf %60, %59 : vector<2x1xf32>
    %cst_31 = arith.constant 2.000000e+00 : f32
    %62 = vector.broadcast %cst_31 : f32 to vector<2x1xf32>
    %63 = arith.subf %62, %61 : vector<2x1xf32>
    %64 = vector.shape_cast %63 : vector<2x1xf32> to vector<1x2x1xf32>
    %cst_32 = arith.constant dense<0.000000e+00> : vector<1xf32>
    %65 = vector.multi_reduction <add>, %64, %cst_32 [1, 2] : vector<1x2x1xf32> to vector<1xf32>
    %66 = vector.shape_cast %65 : vector<1xf32> to vector<1x1x1xf32>
    %67 = vector.extract %66[0, 0, 0] : f32 from vector<1x1x1xf32>
    %cst_33 = arith.constant 2.000000e+00 : f32
    %68 = arith.divf %67, %cst_33 : f32
    %69 = arith.mulf %40, %40 : vector<2x128xf32>
    %cst_34 = arith.constant dense<0.000000e+00> : vector<2xf32>
    %70 = vector.multi_reduction <add>, %69, %cst_34 [1] : vector<2x128xf32> to vector<2xf32>
    %71 = vector.shape_cast %70 : vector<2xf32> to vector<2x1xf32>
    %cst_35 = arith.constant 9.99999996E-13 : f32
    %72 = vector.broadcast %cst_35 : f32 to vector<2x1xf32>
    %73 = arith.maximumf %71, %72 : vector<2x1xf32>
    %74 = arith.mulf %41, %41 : vector<2x128xf32>
    %cst_36 = arith.constant dense<0.000000e+00> : vector<2xf32>
    %75 = vector.multi_reduction <add>, %74, %cst_36 [1] : vector<2x128xf32> to vector<2xf32>
    %76 = vector.shape_cast %75 : vector<2xf32> to vector<2x1xf32>
    %cst_37 = arith.constant 9.99999996E-13 : f32
    %77 = vector.broadcast %cst_37 : f32 to vector<2x1xf32>
    %78 = arith.maximumf %76, %77 : vector<2x1xf32>
    %79 = arith.mulf %40, %41 : vector<2x128xf32>
    %cst_38 = arith.constant dense<0.000000e+00> : vector<2xf32>
    %80 = vector.multi_reduction <add>, %79, %cst_38 [1] : vector<2x128xf32> to vector<2xf32>
    %81 = vector.shape_cast %80 : vector<2xf32> to vector<2x1xf32>
    %82 = math.rsqrt %73 : vector<2x1xf32>
    %83 = arith.mulf %81, %82 : vector<2x1xf32>
    %84 = math.rsqrt %78 : vector<2x1xf32>
    %85 = arith.mulf %83, %84 : vector<2x1xf32>
    %cst_39 = arith.constant 2.000000e+00 : f32
    %86 = vector.broadcast %cst_39 : f32 to vector<2x1xf32>
    %87 = arith.mulf %86, %85 : vector<2x1xf32>
    %cst_40 = arith.constant 2.000000e+00 : f32
    %88 = vector.broadcast %cst_40 : f32 to vector<2x1xf32>
    %89 = arith.subf %88, %87 : vector<2x1xf32>
    %90 = vector.shape_cast %89 : vector<2x1xf32> to vector<1x2x1xf32>
    %cst_41 = arith.constant dense<0.000000e+00> : vector<1xf32>
    %91 = vector.multi_reduction <add>, %90, %cst_41 [1, 2] : vector<1x2x1xf32> to vector<1xf32>
    %92 = vector.shape_cast %91 : vector<1xf32> to vector<1x1x1xf32>
    %93 = vector.extract %92[0, 0, 0] : f32 from vector<1x1x1xf32>
    %cst_42 = arith.constant 2.000000e+00 : f32
    %94 = arith.divf %93, %cst_42 : f32
    %95 = arith.addf %68, %94 : f32
    %cst_43 = arith.constant 5.000000e-01 : f32
    %96 = arith.mulf %cst_43, %95 : f32
    %97 = vector.broadcast %96 : f32 to vector<1x1xf32>
    %c0_44 = arith.constant 0 : index
    %c0_45 = arith.constant 0 : index
    %98 = vector.load %arg6[%c0_44, %c0_45] : memref<1x1xf32, #tpu.memory_space<vmem>>, vector<1x1xf32>
    tpu.vector_store %arg6[%c0_44, %c0_45], %97 {strides = array<i32>} : memref<1x1xf32, #tpu.memory_space<vmem>>, vector<1x1xf32>,
    return
  }
}

</mosaic_0001>

<llo_original>
// kernel: ssmodel_forward.1
$region0: #{ssmodel_forward.1}
  #allocation0 [shape = 'u32[]', space=smem, size = 0x4, offset = 0x4, fixed_abs, tag = 'smem constant byte address 0x4 - core index']
  #allocation1 [shape = 'u32[144,128]{1,0:T(1,128)}', space=vmem, size = 0x12000, scoped, tag = 'internal scratch']
  %s0 = inlined_call_operand.vmem [shape: bf16[1024,128], index: 0, kind: input, shape index: {}]
  %s1 = inlined_call_operand.vmem [shape: bf16[128,128], index: 1, kind: input, shape index: {}]
  %s2 = inlined_call_operand.vmem [shape: f32[1,128], index: 2, kind: input, shape index: {}]
  %s3 = inlined_call_operand.vmem [shape: bf16[4,1024], index: 3, kind: input, shape index: {}]
  %s4 = inlined_call_operand.vmem [shape: bf16[512,128], index: 4, kind: input, shape index: {}]
  %s5 = inlined_call_operand.vmem [shape: f32[4,128], index: 5, kind: input, shape index: {}]
  %s6 = inlined_call_operand.hbm [shape: f32[1,1], index: 6, kind: output, shape index: {}]
  %s7 = sld [smem:[#allocation0]]
  $region34: #{ssmodel_forward.1} parent=0
    _
  %s9 = ssub.s32 1, %s7
  %s10 = scalar_select 0, %s9, %s7
  $region1: #{ssmodel_forward.1} parent=0
    #allocation2 [shape = 'u8[512]{0}', space=vmem, size = 0x400, scoped, tag = 'output window, operand 0, single buffered']
    #allocation3 [shape = 's32[1]{0}', space=sflag, size = 0x4, scoped, tag = 'scoped memory for ssmodel_forward.1']
    %11 = vsyncpa [#allocation3], 0
    // Predicated region
    $region2: #{ssmodel_forward.1} parent=1 // pred_check
      _
    $region3: #{ssmodel_forward.1} parent=1 // pred_check_branch
      %13 = sbr.rel (0) target = $region5
    $region4: #{ssmodel_forward.1} parent=1 // pred_region
      _
    $region5: #{ssmodel_forward.1} parent=1 // pred_fallthru
      _
    // Predicated region
    $region6: #{ssmodel_forward.1} parent=1 // pred_check
      _
    $region7: #{ssmodel_forward.1} parent=1 // pred_check_branch
      %15 = sbr.rel (0) target = $region9
    $region8: #{ssmodel_forward.1} parent=1 // pred_region
      _
    $region9: #{ssmodel_forward.1} parent=1 // pred_fallthru
      _
    // Predicated region
    $region10: #{ssmodel_forward.1} parent=1 // pred_check
      _
    $region11: #{ssmodel_forward.1} parent=1 // pred_check_branch
      %17 = sbr.rel (0) target = $region13
    $region12: #{ssmodel_forward.1} parent=1 // pred_region
      _
    $region13: #{ssmodel_forward.1} parent=1 // pred_fallthru
      _
    // Predicated region
    $region14: #{ssmodel_forward.1} parent=1 // pred_check
      _
    $region15: #{ssmodel_forward.1} parent=1 // pred_check_branch
      %19 = sbr.rel (0) target = $region17
    $region16: #{ssmodel_forward.1} parent=1 // pred_region
      _
    $region17: #{ssmodel_forward.1} parent=1 // pred_fallthru
      _
    // Predicated region
    $region18: #{ssmodel_forward.1} parent=1 // pred_check
      _
    $region19: #{ssmodel_forward.1} parent=1 // pred_check_branch
      %21 = sbr.rel (0) target = $region21
    $region20: #{ssmodel_forward.1} parent=1 // pred_region
      _
    $region21: #{ssmodel_forward.1} parent=1 // pred_fallthru
      _
    // Predicated region
    $region22: #{ssmodel_forward.1} parent=1 // pred_check
      _
    $region23: #{ssmodel_forward.1} parent=1 // pred_check_branch
      %23 = sbr.rel (0) target = $region25
    $region24: #{ssmodel_forward.1} parent=1 // pred_region
      _
    $region25: #{ssmodel_forward.1} parent=1 // pred_fallthru
      _
    %v25 = vld [vmem:[%s0] sm:$0xf]
    %v26 = vld [vmem:[%s0 + $0x4] sm:$0xf]
    %v27 = vld [vmem:[%s0 + $0x8] sm:$0xf]
    %v28 = vld [vmem:[%s0 + $0xc] sm:$0xf]
    %v29 = vld [vmem:[%s0 + $0x10] sm:$0xf]
    %v30 = vld [vmem:[%s0 + $0x14] sm:$0xf]
    %v31 = vld [vmem:[%s0 + $0x18] sm:$0xf]
    %v32 = vld [vmem:[%s0 + $0x1c] sm:$0xf]
    %v33 = vld [vmem:[%s0 + $0x20] sm:$0xf]
    %v34 = vld [vmem:[%s0 + $0x24] sm:$0xf]
    %v35 = vld [vmem:[%s0 + $0x28] sm:$0xf]
    %v36 = vld [vmem:[%s0 + $0x2c] sm:$0xf]
    %v37 = vld [vmem:[%s0 + $0x30] sm:$0xf]
    %v38 = vld [vmem:[%s0 + $0x34] sm:$0xf]
    %v39 = vld [vmem:[%s0 + $0x38] sm:$0xf]
    %v40 = vld [vmem:[%s0 + $0x3c] sm:$0xf]
    %v41 = vld [vmem:[%s0 + $0x40] sm:$0xf]
    %v42 = vld [vmem:[%s0 + $0x44] sm:$0xf]
    %v43 = vld [vmem:[%s0 + $0x48] sm:$0xf]
    %v44 = vld [vmem:[%s0 + $0x4c] sm:$0xf]
    %v45 = vld [vmem:[%s0 + $0x50] sm:$0xf]
    %v46 = vld [vmem:[%s0 + $0x54] sm:$0xf]
    %v47 = vld [vmem:[%s0 + $0x58] sm:$0xf]
    %v48 = vld [vmem:[%s0 + $0x5c] sm:$0xf]
    %v49 = vld [vmem:[%s0 + $0x60] sm:$0xf]
    %v50 = vld [vmem:[%s0 + $0x64] sm:$0xf]
    %v51 = vld [vmem:[%s0 + $0x68] sm:$0xf]
    %v52 = vld [vmem:[%s0 + $0x6c] sm:$0xf]
    %v53 = vld [vmem:[%s0 + $0x70] sm:$0xf]
    %v54 = vld [vmem:[%s0 + $0x74] sm:$0xf]
    %v55 = vld [vmem:[%s0 + $0x78] sm:$0xf]
    %v56 = vld [vmem:[%s0 + $0x7c] sm:$0xf]
    %v57 = vld [vmem:[%s0 + $0x80] sm:$0xf]
    %v58 = vld [vmem:[%s0 + $0x84] sm:$0xf]
    %v59 = vld [vmem:[%s0 + $0x88] sm:$0xf]
    %v60 = vld [vmem:[%s0 + $0x8c] sm:$0xf]
    %v61 = vld [vmem:[%s0 + $0x90] sm:$0xf]
    %v62 = vld [vmem:[%s0 + $0x94] sm:$0xf]
    %v63 = vld [vmem:[%s0 + $0x98] sm:$0xf]
    %v64 = vld [vmem:[%s0 + $0x9c] sm:$0xf]
    %v65 = vld [vmem:[%s0 + $0xa0] sm:$0xf]
    %v66 = vld [vmem:[%s0 + $0xa4] sm:$0xf]
    %v67 = vld [vmem:[%s0 + $0xa8] sm:$0xf]
    %v68 = vld [vmem:[%s0 + $0xac] sm:$0xf]
    %v69 = vld [vmem:[%s0 + $0xb0] sm:$0xf]
    %v70 = vld [vmem:[%s0 + $0xb4] sm:$0xf]
    %v71 = vld [vmem:[%s0 + $0xb8] sm:$0xf]
    %v72 = vld [vmem:[%s0 + $0xbc] sm:$0xf]
    %v73 = vld [vmem:[%s0 + $0xc0] sm:$0xf]
    %v74 = vld [vmem:[%s0 + $0xc4] sm:$0xf]
    %v75 = vld [vmem:[%s0 + $0xc8] sm:$0xf]
    %v76 = vld [vmem:[%s0 + $0xcc] sm:$0xf]
    %v77 = vld [vmem:[%s0 + $0xd0] sm:$0xf]
    %v78 = vld [vmem:[%s0 + $0xd4] sm:$0xf]
    %v79 = vld [vmem:[%s0 + $0xd8] sm:$0xf]
    %v80 = vld [vmem:[%s0 + $0xdc] sm:$0xf]
    %v81 = vld [vmem:[%s0 + $0xe0] sm:$0xf]
    %v82 = vld [vmem:[%s0 + $0xe4] sm:$0xf]
    %v83 = vld [vmem:[%s0 + $0xe8] sm:$0xf]
    %v84 = vld [vmem:[%s0 + $0xec] sm:$0xf]
    %v85 = vld [vmem:[%s0 + $0xf0] sm:$0xf]
    %v86 = vld [vmem:[%s0 + $0xf4] sm:$0xf]
    %v87 = vld [vmem:[%s0 + $0xf8] sm:$0xf]
    %v88 = vld [vmem:[%s0 + $0xfc] sm:$0xf]
    %v89 = vld [vmem:[%s0 + $0x100] sm:$0xf]
    %v90 = vld [vmem:[%s0 + $0x104] sm:$0xf]
    %v91 = vld [vmem:[%s0 + $0x108] sm:$0xf]
    %v92 = vld [vmem:[%s0 + $0x10c] sm:$0xf]
    %v93 = vld [vmem:[%s0 + $0x110] sm:$0xf]
    %v94 = vld [vmem:[%s0 + $0x114] sm:$0xf]
    %v95 = vld [vmem:[%s0 + $0x118] sm:$0xf]
    %v96 = vld [vmem:[%s0 + $0x11c] sm:$0xf]
    %v97 = vld [vmem:[%s0 + $0x120] sm:$0xf]
    %v98 = vld [vmem:[%s0 + $0x124] sm:$0xf]
    %v99 = vld [vmem:[%s0 + $0x128] sm:$0xf]
    %v100 = vld [vmem:[%s0 + $0x12c] sm:$0xf]
    %v101 = vld [vmem:[%s0 + $0x130] sm:$0xf]
    %v102 = vld [vmem:[%s0 + $0x134] sm:$0xf]
    %v103 = vld [vmem:[%s0 + $0x138] sm:$0xf]
    %v104 = vld [vmem:[%s0 + $0x13c] sm:$0xf]
    %v105 = vld [vmem:[%s0 + $0x140] sm:$0xf]
    %v106 = vld [vmem:[%s0 + $0x144] sm:$0xf]
    %v107 = vld [vmem:[%s0 + $0x148] sm:$0xf]
    %v108 = vld [vmem:[%s0 + $0x14c] sm:$0xf]
    %v109 = vld [vmem:[%s0 + $0x150] sm:$0xf]
    %v110 = vld [vmem:[%s0 + $0x154] sm:$0xf]
    %v111 = vld [vmem:[%s0 + $0x158] sm:$0xf]
    %v112 = vld [vmem:[%s0 + $0x15c] sm:$0xf]
    %v113 = vld [vmem:[%s0 + $0x160] sm:$0xf]
    %v114 = vld [vmem:[%s0 + $0x164] sm:$0xf]
    %v115 = vld [vmem:[%s0 + $0x168] sm:$0xf]
    %v116 = vld [vmem:[%s0 + $0x16c] sm:$0xf]
    %v117 = vld [vmem:[%s0 + $0x170] sm:$0xf]
    %v118 = vld [vmem:[%s0 + $0x174] sm:$0xf]
    %v119 = vld [vmem:[%s0 + $0x178] sm:$0xf]
    %v120 = vld [vmem:[%s0 + $0x17c] sm:$0xf]
    %v121 = vld [vmem:[%s0 + $0x180] sm:$0xf]
    %v122 = vld [vmem:[%s0 + $0x184] sm:$0xf]
    %v123 = vld [vmem:[%s0 + $0x188] sm:$0xf]
    %v124 = vld [vmem:[%s0 + $0x18c] sm:$0xf]
    %v125 = vld [vmem:[%s0 + $0x190] sm:$0xf]
    %v126 = vld [vmem:[%s0 + $0x194] sm:$0xf]
    %v127 = vld [vmem:[%s0 + $0x198] sm:$0xf]
    %v128 = vld [vmem:[%s0 + $0x19c] sm:$0xf]
    %v129 = vld [vmem:[%s0 + $0x1a0] sm:$0xf]
    %v130 = vld [vmem:[%s0 + $0x1a4] sm:$0xf]
    %v131 = vld [vmem:[%s0 + $0x1a8] sm:$0xf]
    %v132 = vld [vmem:[%s0 + $0x1ac] sm:$0xf]
    %v133 = vld [vmem:[%s0 + $0x1b0] sm:$0xf]
    %v134 = vld [vmem:[%s0 + $0x1b4] sm:$0xf]
    %v135 = vld [vmem:[%s0 + $0x1b8] sm:$0xf]
    %v136 = vld [vmem:[%s0 + $0x1bc] sm:$0xf]
    %v137 = vld [vmem:[%s0 + $0x1c0] sm:$0xf]
    %v138 = vld [vmem:[%s0 + $0x1c4] sm:$0xf]
    %v139 = vld [vmem:[%s0 + $0x1c8] sm:$0xf]
    %v140 = vld [vmem:[%s0 + $0x1cc] sm:$0xf]
    %v141 = vld [vmem:[%s0 + $0x1d0] sm:$0xf]
    %v142 = vld [vmem:[%s0 + $0x1d4] sm:$0xf]
    %v143 = vld [vmem:[%s0 + $0x1d8] sm:$0xf]
    %v144 = vld [vmem:[%s0 + $0x1dc] sm:$0xf]
    %v145 = vld [vmem:[%s0 + $0x1e0] sm:$0xf]
    %v146 = vld [vmem:[%s0 + $0x1e4] sm:$0xf]
    %v147 = vld [vmem:[%s0 + $0x1e8] sm:$0xf]
    %v148 = vld [vmem:[%s0 + $0x1ec] sm:$0xf]
    %v149 = vld [vmem:[%s0 + $0x1f0] sm:$0xf]
    %v150 = vld [vmem:[%s0 + $0x1f4] sm:$0xf]
    %v151 = vld [vmem:[%s0 + $0x1f8] sm:$0xf]
    %v152 = vld [vmem:[%s0 + $0x1fc] sm:$0xf]
    %v153 = vld [vmem:[%s1] sm:$0xf]
    %v154 = vld [vmem:[%s1 + $0x4] sm:$0xf]
    %v155 = vld [vmem:[%s1 + $0x8] sm:$0xf]
    %v156 = vld [vmem:[%s1 + $0xc] sm:$0xf]
    %v157 = vld [vmem:[%s1 + $0x10] sm:$0xf]
    %v158 = vld [vmem:[%s1 + $0x14] sm:$0xf]
    %v159 = vld [vmem:[%s1 + $0x18] sm:$0xf]
    %v160 = vld [vmem:[%s1 + $0x1c] sm:$0xf]
    %v161 = vld [vmem:[%s1 + $0x20] sm:$0xf]
    %v162 = vld [vmem:[%s1 + $0x24] sm:$0xf]
    %v163 = vld [vmem:[%s1 + $0x28] sm:$0xf]
    %v164 = vld [vmem:[%s1 + $0x2c] sm:$0xf]
    %v165 = vld [vmem:[%s1 + $0x30] sm:$0xf]
    %v166 = vld [vmem:[%s1 + $0x34] sm:$0xf]
    %v167 = vld [vmem:[%s1 + $0x38] sm:$0xf]
    %v168 = vld [vmem:[%s1 + $0x3c] sm:$0xf]
    %v169 = vld [vmem:[%s2] sm:$0x1]
    %v171 = vlaneseq
    %v172 = vshrl.u32 %v171, 7
    %v173 = vsub.s32 0, %v172
    %v174 = vrot.slane %v169, %v173
    %v304 = vunpack.c.l.b16 %v25
    %v305 = vunpack.c.l.b16 %v26
    %v306 = vunpack.c.l.b16 %v27
    %v307 = vunpack.c.l.b16 %v28
    %v308 = vunpack.c.l.b16 %v29
    %v309 = vunpack.c.l.b16 %v30
    %v310 = vunpack.c.l.b16 %v31
    %v311 = vunpack.c.l.b16 %v32
    %v312 = vunpack.c.l.b16 %v33
    %v313 = vunpack.c.l.b16 %v34
    %v314 = vunpack.c.l.b16 %v35
    %v315 = vunpack.c.l.b16 %v36
    %v316 = vunpack.c.l.b16 %v37
    %v317 = vunpack.c.l.b16 %v38
    %v318 = vunpack.c.l.b16 %v39
    %v319 = vunpack.c.l.b16 %v40
    %v320 = vunpack.c.l.b16 %v41
    %v321 = vunpack.c.l.b16 %v42
    %v322 = vunpack.c.l.b16 %v43
    %v323 = vunpack.c.l.b16 %v44
    %v324 = vunpack.c.l.b16 %v45
    %v325 = vunpack.c.l.b16 %v46
    %v326 = vunpack.c.l.b16 %v47
    %v327 = vunpack.c.l.b16 %v48
    %v328 = vunpack.c.l.b16 %v49
    %v329 = vunpack.c.l.b16 %v50
    %v330 = vunpack.c.l.b16 %v51
    %v331 = vunpack.c.l.b16 %v52
    %v332 = vunpack.c.l.b16 %v53
    %v333 = vunpack.c.l.b16 %v54
    %v334 = vunpack.c.l.b16 %v55
    %v335 = vunpack.c.l.b16 %v56
    %v336 = vunpack.c.l.b16 %v57
    %v337 = vunpack.c.l.b16 %v58
    %v338 = vunpack.c.l.b16 %v59
    %v339 = vunpack.c.l.b16 %v60
    %v340 = vunpack.c.l.b16 %v61
    %v341 = vunpack.c.l.b16 %v62
    %v342 = vunpack.c.l.b16 %v63
    %v343 = vunpack.c.l.b16 %v64
    %v344 = vunpack.c.l.b16 %v65
    %v345 = vunpack.c.l.b16 %v66
    %v346 = vunpack.c.l.b16 %v67
    %v347 = vunpack.c.l.b16 %v68
    %v348 = vunpack.c.l.b16 %v69
    %v349 = vunpack.c.l.b16 %v70
    %v350 = vunpack.c.l.b16 %v71
    %v351 = vunpack.c.l.b16 %v72
    %v352 = vunpack.c.l.b16 %v73
    %v353 = vunpack.c.l.b16 %v74
    %v354 = vunpack.c.l.b16 %v75
    %v355 = vunpack.c.l.b16 %v76
    %v356 = vunpack.c.l.b16 %v77
    %v357 = vunpack.c.l.b16 %v78
    %v358 = vunpack.c.l.b16 %v79
    %v359 = vunpack.c.l.b16 %v80
    %v360 = vunpack.c.l.b16 %v81
    %v361 = vunpack.c.l.b16 %v82
    %v362 = vunpack.c.l.b16 %v83
    %v363 = vunpack.c.l.b16 %v84
    %v364 = vunpack.c.l.b16 %v85
    %v365 = vunpack.c.l.b16 %v86
    %v366 = vunpack.c.l.b16 %v87
    %v367 = vunpack.c.l.b16 %v88
    %v368 = vunpack.c.l.b16 %v89
    %v369 = vunpack.c.l.b16 %v90
    %v370 = vunpack.c.l.b16 %v91
    %v371 = vunpack.c.l.b16 %v92
    %v372 = vunpack.c.l.b16 %v93
    %v373 = vunpack.c.l.b16 %v94
    %v374 = vunpack.c.l.b16 %v95
    %v375 = vunpack.c.l.b16 %v96
    %v376 = vunpack.c.l.b16 %v97
    %v377 = vunpack.c.l.b16 %v98
    %v378 = vunpack.c.l.b16 %v99
    %v379 = vunpack.c.l.b16 %v100
    %v380 = vunpack.c.l.b16 %v101
    %v381 = vunpack.c.l.b16 %v102
    %v382 = vunpack.c.l.b16 %v103
    %v383 = vunpack.c.l.b16 %v104
    %v384 = vunpack.c.l.b16 %v105
    %v385 = vunpack.c.l.b16 %v106
    %v386 = vunpack.c.l.b16 %v107
    %v387 = vunpack.c.l.b16 %v108
    %v388 = vunpack.c.l.b16 %v109
    %v389 = vunpack.c.l.b16 %v110
    %v390 = vunpack.c.l.b16 %v111
    %v391 = vunpack.c.l.b16 %v112
    %v392 = vunpack.c.l.b16 %v113
    %v393 = vunpack.c.l.b16 %v114
    %v394 = vunpack.c.l.b16 %v115
    %v395 = vunpack.c.l.b16 %v116
    %v396 = vunpack.c.l.b16 %v117
    %v397 = vunpack.c.l.b16 %v118
    %v398 = vunpack.c.l.b16 %v119
    %v399 = vunpack.c.l.b16 %v120
    %v400 = vunpack.c.l.b16 %v121
    %v401 = vunpack.c.l.b16 %v122
    %v402 = vunpack.c.l.b16 %v123
    %v403 = vunpack.c.l.b16 %v124
    %v404 = vunpack.c.l.b16 %v125
    %v405 = vunpack.c.l.b16 %v126
    %v406 = vunpack.c.l.b16 %v127
    %v407 = vunpack.c.l.b16 %v128
    %v408 = vunpack.c.l.b16 %v129
    %v409 = vunpack.c.l.b16 %v130
    %v410 = vunpack.c.l.b16 %v131
    %v411 = vunpack.c.l.b16 %v132
    %v412 = vunpack.c.l.b16 %v133
    %v413 = vunpack.c.l.b16 %v134
    %v414 = vunpack.c.l.b16 %v135
    %v415 = vunpack.c.l.b16 %v136
    %v416 = vunpack.c.l.b16 %v137
    %v417 = vunpack.c.l.b16 %v138
    %v418 = vunpack.c.l.b16 %v139
    %v419 = vunpack.c.l.b16 %v140
    %v420 = vunpack.c.l.b16 %v141
    %v421 = vunpack.c.l.b16 %v142
    %v422 = vunpack.c.l.b16 %v143
    %v423 = vunpack.c.l.b16 %v144
    %v424 = vunpack.c.l.b16 %v145
    %v425 = vunpack.c.l.b16 %v146
    %v426 = vunpack.c.l.b16 %v147
    %v427 = vunpack.c.l.b16 %v148
    %v428 = vunpack.c.l.b16 %v149
    %v429 = vunpack.c.l.b16 %v150
    %v430 = vunpack.c.l.b16 %v151
    %v431 = vunpack.c.l.b16 %v152
    %v432 = vpack.c.b16 %v305, %v304
    %v433 = vpack.c.b16 %v307, %v306
    %v434 = vpack.c.b16 %v309, %v308
    %v435 = vpack.c.b16 %v311, %v310
    %v436 = vpack.c.b16 %v313, %v312
    %v437 = vpack.c.b16 %v315, %v314
    %v438 = vpack.c.b16 %v317, %v316
    %v439 = vpack.c.b16 %v319, %v318
    %v440 = vpack.c.b16 %v321, %v320
    %v441 = vpack.c.b16 %v323, %v322
    %v442 = vpack.c.b16 %v325, %v324
    %v443 = vpack.c.b16 %v327, %v326
    %v444 = vpack.c.b16 %v329, %v328
    %v445 = vpack.c.b16 %v331, %v330
    %v446 = vpack.c.b16 %v333, %v332
    %v447 = vpack.c.b16 %v335, %v334
    %v448 = vpack.c.b16 %v337, %v336
    %v449 = vpack.c.b16 %v339, %v338
    %v450 = vpack.c.b16 %v341, %v340
    %v451 = vpack.c.b16 %v343, %v342
    %v452 = vpack.c.b16 %v345, %v344
    %v453 = vpack.c.b16 %v347, %v346
    %v454 = vpack.c.b16 %v349, %v348
    %v455 = vpack.c.b16 %v351, %v350
    %v456 = vpack.c.b16 %v353, %v352
    %v457 = vpack.c.b16 %v355, %v354
    %v458 = vpack.c.b16 %v357, %v356
    %v459 = vpack.c.b16 %v359, %v358
    %v460 = vpack.c.b16 %v361, %v360
    %v461 = vpack.c.b16 %v363, %v362
    %v462 = vpack.c.b16 %v365, %v364
    %v463 = vpack.c.b16 %v367, %v366
    %v464 = vpack.c.b16 %v369, %v368
    %v465 = vpack.c.b16 %v371, %v370
    %v466 = vpack.c.b16 %v373, %v372
    %v467 = vpack.c.b16 %v375, %v374
    %v468 = vpack.c.b16 %v377, %v376
    %v469 = vpack.c.b16 %v379, %v378
    %v470 = vpack.c.b16 %v381, %v380
    %v471 = vpack.c.b16 %v383, %v382
    %v472 = vpack.c.b16 %v385, %v384
    %v473 = vpack.c.b16 %v387, %v386
    %v474 = vpack.c.b16 %v389, %v388
    %v475 = vpack.c.b16 %v391, %v390
    %v476 = vpack.c.b16 %v393, %v392
    %v477 = vpack.c.b16 %v395, %v394
    %v478 = vpack.c.b16 %v397, %v396
    %v479 = vpack.c.b16 %v399, %v398
    %v480 = vpack.c.b16 %v401, %v400
    %v481 = vpack.c.b16 %v403, %v402
    %v482 = vpack.c.b16 %v405, %v404
    %v483 = vpack.c.b16 %v407, %v406
    %v484 = vpack.c.b16 %v409, %v408
    %v485 = vpack.c.b16 %v411, %v410
    %v486 = vpack.c.b16 %v413, %v412
    %v487 = vpack.c.b16 %v415, %v414
    %v488 = vpack.c.b16 %v417, %v416
    %v489 = vpack.c.b16 %v419, %v418
    %v490 = vpack.c.b16 %v421, %v420
    %v491 = vpack.c.b16 %v423, %v422
    %v492 = vpack.c.b16 %v425, %v424
    %v493 = vpack.c.b16 %v427, %v426
    %v494 = vpack.c.b16 %v429, %v428
    %v495 = vpack.c.b16 %v431, %v430
    %v576 = vunpack.c.l.b16 %v153
    %v577 = vunpack.c.l.b16 %v154
    %v578 = vunpack.c.l.b16 %v155
    %v579 = vunpack.c.l.b16 %v156
    %v580 = vunpack.c.l.b16 %v157
    %v581 = vunpack.c.l.b16 %v158
    %v582 = vunpack.c.l.b16 %v159
    %v583 = vunpack.c.l.b16 %v160
    %v584 = vunpack.c.l.b16 %v161
    %v585 = vunpack.c.l.b16 %v162
    %v586 = vunpack.c.l.b16 %v163
    %v587 = vunpack.c.l.b16 %v164
    %v588 = vunpack.c.l.b16 %v165
    %v589 = vunpack.c.l.b16 %v166
    %v590 = vunpack.c.l.b16 %v167
    %v591 = vunpack.c.l.b16 %v168
    %v592 = vpack.c.b16 %v577, %v576
    %v593 = vpack.c.b16 %v579, %v578
    %v594 = vpack.c.b16 %v581, %v580
    %v595 = vpack.c.b16 %v583, %v582
    %v596 = vpack.c.b16 %v585, %v584
    %v597 = vpack.c.b16 %v587, %v586
    %v598 = vpack.c.b16 %v589, %v588
    %v599 = vpack.c.b16 %v591, %v590
    %608 = vmatprep.subr.bf16.mxu0 0
    %609 = vmatpush1.bf16.msra.mxu0 %v599
    %610 = vmatprep.subr.bf16.mxu0 0
    %611 = vmatpush1.bf16.msra.mxu0 %v598
    %612 = vmatprep.subr.bf16.mxu0 0
    %613 = vmatpush1.bf16.msra.mxu0 %v597
    %614 = vmatprep.subr.bf16.mxu0 0
    %615 = vmatpush1.bf16.msra.mxu0 %v596
    %616 = vmatprep.subr.bf16.mxu0 0
    %617 = vmatpush1.bf16.msra.mxu0 %v595
    %618 = vmatprep.subr.bf16.mxu0 0
    %619 = vmatpush1.bf16.msra.mxu0 %v594
    %620 = vmatprep.subr.bf16.mxu0 0
    %621 = vmatpush1.bf16.msra.mxu0 %v593
    %622 = vmatprep.subr.bf16.mxu0 0
    %623 = vmatpush1.bf16.msra.mxu0 %v592
    %624 = vmatprep.subr.bf16.mxu0 0
    %625 = vmatpush2.bf16.msra.mxu0 0
    %626 = vmatprep.subr.bf16.mxu0 0
    %627 = vmatpush2.bf16.msra.mxu0 0
    %628 = vmatprep.subr.bf16.mxu0 0
    %629 = vmatpush2.bf16.msra.mxu0 0
    %630 = vmatprep.subr.bf16.mxu0 0
    %631 = vmatpush2.bf16.msra.mxu0 0
    %632 = vmatprep.subr.bf16.mxu0 0
    %633 = vmatpush2.bf16.msra.mxu0 0
    %634 = vmatprep.subr.bf16.mxu0 0
    %635 = vmatpush2.bf16.msra.mxu0 0
    %636 = vmatprep.subr.bf16.mxu0 0
    %637 = vmatpush2.bf16.msra.mxu0 0
    %638 = vmatprep.subr.bf16.mxu0 0
    %639 = vmatpush2.bf16.msra.mxu0 0
    %640 = vmatprep.mubr.bf16.mxu0 0
    %641 = vmatmul.mubr.bf16.gmra.mxu0 %v432
    %v642 = vpop.f32.mrf.mxu0
    %v643 = vadd.f32 %v174, %v642
    %v644 = vpop.f32.mrf.mxu0
    %v645 = vpop.f32.mrf.mxu0
    %v646 = vadd.f32 %v174, %v645
    %v647 = vpop.f32.mrf.mxu0
    %648 = vmatprep.mubr.bf16.mxu0 0
    %649 = vmatmul.mubr.bf16.gmra.mxu0 %v433
    %v650 = vpop.f32.mrf.mxu0
    %v651 = vadd.f32 %v174, %v650
    %v652 = vpop.f32.mrf.mxu0
    %v653 = vpop.f32.mrf.mxu0
    %v654 = vadd.f32 %v174, %v653
    %v655 = vpop.f32.mrf.mxu0
    %656 = vmatprep.mubr.bf16.mxu0 0
    %657 = vmatmul.mubr.bf16.gmra.mxu0 %v434
    %v658 = vpop.f32.mrf.mxu0
    %v659 = vadd.f32 %v174, %v658
    %v660 = vpop.f32.mrf.mxu0
    %v661 = vpop.f32.mrf.mxu0
    %v662 = vadd.f32 %v174, %v661
    %v663 = vpop.f32.mrf.mxu0
    %664 = vmatprep.mubr.bf16.mxu0 0
    %665 = vmatmul.mubr.bf16.gmra.mxu0 %v435
    %v666 = vpop.f32.mrf.mxu0
    %v667 = vadd.f32 %v174, %v666
    %v668 = vpop.f32.mrf.mxu0
    %v669 = vpop.f32.mrf.mxu0
    %v670 = vadd.f32 %v174, %v669
    %v671 = vpop.f32.mrf.mxu0
    %672 = vmatprep.mubr.bf16.mxu0 0
    %673 = vmatmul.mubr.bf16.gmra.mxu0 %v436
    %v674 = vpop.f32.mrf.mxu0
    %v675 = vadd.f32 %v174, %v674
    %v676 = vpop.f32.mrf.mxu0
    %v677 = vpop.f32.mrf.mxu0
    %v678 = vadd.f32 %v174, %v677
    %v679 = vpop.f32.mrf.mxu0
    %680 = vmatprep.mubr.bf16.mxu0 0
    %681 = vmatmul.mubr.bf16.gmra.mxu0 %v437
    %v682 = vpop.f32.mrf.mxu0
    %v683 = vadd.f32 %v174, %v682
    %v684 = vpop.f32.mrf.mxu0
    %v685 = vpop.f32.mrf.mxu0
    %v686 = vadd.f32 %v174, %v685
    %v687 = vpop.f32.mrf.mxu0
    %688 = vmatprep.mubr.bf16.mxu0 0
    %689 = vmatmul.mubr.bf16.gmra.mxu0 %v438
    %v690 = vpop.f32.mrf.mxu0
    %v691 = vadd.f32 %v174, %v690
    %v692 = vpop.f32.mrf.mxu0
    %v693 = vpop.f32.mrf.mxu0
    %v694 = vadd.f32 %v174, %v693
    %v695 = vpop.f32.mrf.mxu0
    %696 = vmatprep.mubr.bf16.mxu0 0
    %697 = vmatmul.mubr.bf16.gmra.mxu0 %v439
    %v698 = vpop.f32.mrf.mxu0
    %v699 = vadd.f32 %v174, %v698
    %v700 = vpop.f32.mrf.mxu0
    %v701 = vpop.f32.mrf.mxu0
    %v702 = vadd.f32 %v174, %v701
    %v703 = vpop.f32.mrf.mxu0
    %704 = vmatprep.mubr.bf16.mxu0 0
    %705 = vmatmul.mubr.bf16.gmra.mxu0 %v440
    %v706 = vpop.f32.mrf.mxu0
    %v707 = vadd.f32 %v174, %v706
    %v708 = vpop.f32.mrf.mxu0
    %v709 = vpop.f32.mrf.mxu0
    %v710 = vadd.f32 %v174, %v709
    %v711 = vpop.f32.mrf.mxu0
    %712 = vmatprep.mubr.bf16.mxu0 0
    %713 = vmatmul.mubr.bf16.gmra.mxu0 %v441
    %v714 = vpop.f32.mrf.mxu0
    %v715 = vadd.f32 %v174, %v714
    %v716 = vpop.f32.mrf.mxu0
    %v717 = vpop.f32.mrf.mxu0
    %v718 = vadd.f32 %v174, %v717
    %v719 = vpop.f32.mrf.mxu0
    %720 = vmatprep.mubr.bf16.mxu0 0
    %721 = vmatmul.mubr.bf16.gmra.mxu0 %v442
    %v722 = vpop.f32.mrf.mxu0
    %v723 = vadd.f32 %v174, %v722
    %v724 = vpop.f32.mrf.mxu0
    %v725 = vpop.f32.mrf.mxu0
    %v726 = vadd.f32 %v174, %v725
    %v727 = vpop.f32.mrf.mxu0
    %728 = vmatprep.mubr.bf16.mxu0 0
    %729 = vmatmul.mubr.bf16.gmra.mxu0 %v443
    %v730 = vpop.f32.mrf.mxu0
    %v731 = vadd.f32 %v174, %v730
    %v732 = vpop.f32.mrf.mxu0
    %v733 = vpop.f32.mrf.mxu0
    %v734 = vadd.f32 %v174, %v733
    %v735 = vpop.f32.mrf.mxu0
    %736 = vmatprep.mubr.bf16.mxu0 0
    %737 = vmatmul.mubr.bf16.gmra.mxu0 %v444
    %v738 = vpop.f32.mrf.mxu0
    %v739 = vadd.f32 %v174, %v738
    %v740 = vpop.f32.mrf.mxu0
    %v741 = vpop.f32.mrf.mxu0
    %v742 = vadd.f32 %v174, %v741
    %v743 = vpop.f32.mrf.mxu0
    %744 = vmatprep.mubr.bf16.mxu0 0
    %745 = vmatmul.mubr.bf16.gmra.mxu0 %v445
    %v746 = vpop.f32.mrf.mxu0
    %v747 = vadd.f32 %v174, %v746
    %v748 = vpop.f32.mrf.mxu0
    %v749 = vpop.f32.mrf.mxu0
    %v750 = vadd.f32 %v174, %v749
    %v751 = vpop.f32.mrf.mxu0
    %752 = vmatprep.mubr.bf16.mxu0 0
    %753 = vmatmul.mubr.bf16.gmra.mxu0 %v446
    %v754 = vpop.f32.mrf.mxu0
    %v755 = vadd.f32 %v174, %v754
    %v756 = vpop.f32.mrf.mxu0
    %v757 = vpop.f32.mrf.mxu0
    %v758 = vadd.f32 %v174, %v757
    %v759 = vpop.f32.mrf.mxu0
    %760 = vmatprep.mubr.bf16.mxu0 0
    %761 = vmatmul.mubr.bf16.gmra.mxu0 %v447
    %v762 = vpop.f32.mrf.mxu0
    %v763 = vadd.f32 %v174, %v762
    %v764 = vpop.f32.mrf.mxu0
    %v765 = vpop.f32.mrf.mxu0
    %v766 = vadd.f32 %v174, %v765
    %v767 = vpop.f32.mrf.mxu0
    %768 = vmatprep.mubr.bf16.mxu0 0
    %769 = vmatmul.mubr.bf16.gmra.mxu0 %v448
    %v770 = vpop.f32.mrf.mxu0
    %v771 = vadd.f32 %v174, %v770
    %v772 = vpop.f32.mrf.mxu0
    %v773 = vpop.f32.mrf.mxu0
    %v774 = vadd.f32 %v174, %v773
    %v775 = vpop.f32.mrf.mxu0
    %776 = vmatprep.mubr.bf16.mxu0 0
    %777 = vmatmul.mubr.bf16.gmra.mxu0 %v449
    %v778 = vpop.f32.mrf.mxu0
    %v779 = vadd.f32 %v174, %v778
    %v780 = vpop.f32.mrf.mxu0
    %v781 = vpop.f32.mrf.mxu0
    %v782 = vadd.f32 %v174, %v781
    %v783 = vpop.f32.mrf.mxu0
    %784 = vmatprep.mubr.bf16.mxu0 0
    %785 = vmatmul.mubr.bf16.gmra.mxu0 %v450
    %v786 = vpop.f32.mrf.mxu0
    %v787 = vadd.f32 %v174, %v786
    %v788 = vpop.f32.mrf.mxu0
    %v789 = vpop.f32.mrf.mxu0
    %v790 = vadd.f32 %v174, %v789
    %v791 = vpop.f32.mrf.mxu0
    %792 = vmatprep.mubr.bf16.mxu0 0
    %793 = vmatmul.mubr.bf16.gmra.mxu0 %v451
    %v794 = vpop.f32.mrf.mxu0
    %v795 = vadd.f32 %v174, %v794
    %v796 = vpop.f32.mrf.mxu0
    %v797 = vpop.f32.mrf.mxu0
    %v798 = vadd.f32 %v174, %v797
    %v799 = vpop.f32.mrf.mxu0
    %800 = vmatprep.mubr.bf16.mxu0 0
    %801 = vmatmul.mubr.bf16.gmra.mxu0 %v452
    %v802 = vpop.f32.mrf.mxu0
    %v803 = vadd.f32 %v174, %v802
    %v804 = vpop.f32.mrf.mxu0
    %v805 = vpop.f32.mrf.mxu0
    %v806 = vadd.f32 %v174, %v805
    %v807 = vpop.f32.mrf.mxu0
    %808 = vmatprep.mubr.bf16.mxu0 0
    %809 = vmatmul.mubr.bf16.gmra.mxu0 %v453
    %v810 = vpop.f32.mrf.mxu0
    %v811 = vadd.f32 %v174, %v810
    %v812 = vpop.f32.mrf.mxu0
    %v813 = vpop.f32.mrf.mxu0
    %v814 = vadd.f32 %v174, %v813
    %v815 = vpop.f32.mrf.mxu0
    %816 = vmatprep.mubr.bf16.mxu0 0
    %817 = vmatmul.mubr.bf16.gmra.mxu0 %v454
    %v818 = vpop.f32.mrf.mxu0
    %v819 = vadd.f32 %v174, %v818
    %v820 = vpop.f32.mrf.mxu0
    %v821 = vpop.f32.mrf.mxu0
    %v822 = vadd.f32 %v174, %v821
    %v823 = vpop.f32.mrf.mxu0
    %824 = vmatprep.mubr.bf16.mxu0 0
    %825 = vmatmul.mubr.bf16.gmra.mxu0 %v455
    %v826 = vpop.f32.mrf.mxu0
    %v827 = vadd.f32 %v174, %v826
    %v828 = vpop.f32.mrf.mxu0
    %v829 = vpop.f32.mrf.mxu0
    %v830 = vadd.f32 %v174, %v829
    %v831 = vpop.f32.mrf.mxu0
    %832 = vmatprep.mubr.bf16.mxu0 0
    %833 = vmatmul.mubr.bf16.gmra.mxu0 %v456
    %v834 = vpop.f32.mrf.mxu0
    %v835 = vadd.f32 %v174, %v834
    %v836 = vpop.f32.mrf.mxu0
    %v837 = vpop.f32.mrf.mxu0
    %v838 = vadd.f32 %v174, %v837
    %v839 = vpop.f32.mrf.mxu0
    %840 = vmatprep.mubr.bf16.mxu0 0
    %841 = vmatmul.mubr.bf16.gmra.mxu0 %v457
    %v842 = vpop.f32.mrf.mxu0
    %v843 = vadd.f32 %v174, %v842
    %v844 = vpop.f32.mrf.mxu0
    %v845 = vpop.f32.mrf.mxu0
    %v846 = vadd.f32 %v174, %v845
    %v847 = vpop.f32.mrf.mxu0
    %848 = vmatprep.mubr.bf16.mxu0 0
    %849 = vmatmul.mubr.bf16.gmra.mxu0 %v458
    %v850 = vpop.f32.mrf.mxu0
    %v851 = vadd.f32 %v174, %v850
    %v852 = vpop.f32.mrf.mxu0
    %v853 = vpop.f32.mrf.mxu0
    %v854 = vadd.f32 %v174, %v853
    %v855 = vpop.f32.mrf.mxu0
    %856 = vmatprep.mubr.bf16.mxu0 0
    %857 = vmatmul.mubr.bf16.gmra.mxu0 %v459
    %v858 = vpop.f32.mrf.mxu0
    %v859 = vadd.f32 %v174, %v858
    %v860 = vpop.f32.mrf.mxu0
    %v861 = vpop.f32.mrf.mxu0
    %v862 = vadd.f32 %v174, %v861
    %v863 = vpop.f32.mrf.mxu0
    %864 = vmatprep.mubr.bf16.mxu0 0
    %865 = vmatmul.mubr.bf16.gmra.mxu0 %v460
    %v866 = vpop.f32.mrf.mxu0
    %v867 = vadd.f32 %v174, %v866
    %v868 = vpop.f32.mrf.mxu0
    %v869 = vpop.f32.mrf.mxu0
    %v870 = vadd.f32 %v174, %v869
    %v871 = vpop.f32.mrf.mxu0
    %872 = vmatprep.mubr.bf16.mxu0 0
    %873 = vmatmul.mubr.bf16.gmra.mxu0 %v461
    %v874 = vpop.f32.mrf.mxu0
    %v875 = vadd.f32 %v174, %v874
    %v876 = vpop.f32.mrf.mxu0
    %v877 = vpop.f32.mrf.mxu0
    %v878 = vadd.f32 %v174, %v877
    %v879 = vpop.f32.mrf.mxu0
    %880 = vmatprep.mubr.bf16.mxu0 0
    %881 = vmatmul.mubr.bf16.gmra.mxu0 %v462
    %v882 = vpop.f32.mrf.mxu0
    %v883 = vadd.f32 %v174, %v882
    %v884 = vpop.f32.mrf.mxu0
    %v885 = vpop.f32.mrf.mxu0
    %v886 = vadd.f32 %v174, %v885
    %v887 = vpop.f32.mrf.mxu0
    %888 = vmatprep.mubr.bf16.mxu0 0
    %889 = vmatmul.mubr.bf16.gmra.mxu0 %v463
    %v890 = vpop.f32.mrf.mxu0
    %v891 = vadd.f32 %v174, %v890
    %v892 = vpop.f32.mrf.mxu0
    %v893 = vpop.f32.mrf.mxu0
    %v894 = vadd.f32 %v174, %v893
    %v895 = vpop.f32.mrf.mxu0
    %896 = vmatprep.mubr.bf16.mxu0 0
    %897 = vmatmul.mubr.bf16.gmra.mxu0 %v464
    %v898 = vpop.f32.mrf.mxu0
    %v899 = vadd.f32 %v174, %v898
    %v900 = vpop.f32.mrf.mxu0
    %v901 = vpop.f32.mrf.mxu0
    %v902 = vadd.f32 %v174, %v901
    %v903 = vpop.f32.mrf.mxu0
    %904 = vmatprep.mubr.bf16.mxu0 0
    %905 = vmatmul.mubr.bf16.gmra.mxu0 %v465
    %v906 = vpop.f32.mrf.mxu0
    %v907 = vadd.f32 %v174, %v906
    %v908 = vpop.f32.mrf.mxu0
    %v909 = vpop.f32.mrf.mxu0
    %v910 = vadd.f32 %v174, %v909
    %v911 = vpop.f32.mrf.mxu0
    %912 = vmatprep.mubr.bf16.mxu0 0
    %913 = vmatmul.mubr.bf16.gmra.mxu0 %v466
    %v914 = vpop.f32.mrf.mxu0
    %v915 = vadd.f32 %v174, %v914
    %v916 = vpop.f32.mrf.mxu0
    %v917 = vpop.f32.mrf.mxu0
    %v918 = vadd.f32 %v174, %v917
    %v919 = vpop.f32.mrf.mxu0
    %920 = vmatprep.mubr.bf16.mxu0 0
    %921 = vmatmul.mubr.bf16.gmra.mxu0 %v467
    %v922 = vpop.f32.mrf.mxu0
    %v923 = vadd.f32 %v174, %v922
    %v924 = vpop.f32.mrf.mxu0
    %v925 = vpop.f32.mrf.mxu0
    %v926 = vadd.f32 %v174, %v925
    %v927 = vpop.f32.mrf.mxu0
    %928 = vmatprep.mubr.bf16.mxu0 0
    %929 = vmatmul.mubr.bf16.gmra.mxu0 %v468
    %v930 = vpop.f32.mrf.mxu0
    %v931 = vadd.f32 %v174, %v930
    %v932 = vpop.f32.mrf.mxu0
    %v933 = vpop.f32.mrf.mxu0
    %v934 = vadd.f32 %v174, %v933
    %v935 = vpop.f32.mrf.mxu0
    %936 = vmatprep.mubr.bf16.mxu0 0
    %937 = vmatmul.mubr.bf16.gmra.mxu0 %v469
    %v938 = vpop.f32.mrf.mxu0
    %v939 = vadd.f32 %v174, %v938
    %v940 = vpop.f32.mrf.mxu0
    %v941 = vpop.f32.mrf.mxu0
    %v942 = vadd.f32 %v174, %v941
    %v943 = vpop.f32.mrf.mxu0
    %944 = vmatprep.mubr.bf16.mxu0 0
    %945 = vmatmul.mubr.bf16.gmra.mxu0 %v470
    %v946 = vpop.f32.mrf.mxu0
    %v947 = vadd.f32 %v174, %v946
    %v948 = vpop.f32.mrf.mxu0
    %v949 = vpop.f32.mrf.mxu0
    %v950 = vadd.f32 %v174, %v949
    %v951 = vpop.f32.mrf.mxu0
    %952 = vmatprep.mubr.bf16.mxu0 0
    %953 = vmatmul.mubr.bf16.gmra.mxu0 %v471
    %v954 = vpop.f32.mrf.mxu0
    %v955 = vadd.f32 %v174, %v954
    %v956 = vpop.f32.mrf.mxu0
    %v957 = vpop.f32.mrf.mxu0
    %v958 = vadd.f32 %v174, %v957
    %v959 = vpop.f32.mrf.mxu0
    %960 = vmatprep.mubr.bf16.mxu0 0
    %961 = vmatmul.mubr.bf16.gmra.mxu0 %v472
    %v962 = vpop.f32.mrf.mxu0
    %v963 = vadd.f32 %v174, %v962
    %v964 = vpop.f32.mrf.mxu0
    %v965 = vpop.f32.mrf.mxu0
    %v966 = vadd.f32 %v174, %v965
    %v967 = vpop.f32.mrf.mxu0
    %968 = vmatprep.mubr.bf16.mxu0 0
    %969 = vmatmul.mubr.bf16.gmra.mxu0 %v473
    %v970 = vpop.f32.mrf.mxu0
    %v971 = vadd.f32 %v174, %v970
    %v972 = vpop.f32.mrf.mxu0
    %v973 = vpop.f32.mrf.mxu0
    %v974 = vadd.f32 %v174, %v973
    %v975 = vpop.f32.mrf.mxu0
    %976 = vmatprep.mubr.bf16.mxu0 0
    %977 = vmatmul.mubr.bf16.gmra.mxu0 %v474
    %v978 = vpop.f32.mrf.mxu0
    %v979 = vadd.f32 %v174, %v978
    %v980 = vpop.f32.mrf.mxu0
    %v981 = vpop.f32.mrf.mxu0
    %v982 = vadd.f32 %v174, %v981
    %v983 = vpop.f32.mrf.mxu0
    %984 = vmatprep.mubr.bf16.mxu0 0
    %985 = vmatmul.mubr.bf16.gmra.mxu0 %v475
    %v986 = vpop.f32.mrf.mxu0
    %v987 = vadd.f32 %v174, %v986
    %v988 = vpop.f32.mrf.mxu0
    %v989 = vpop.f32.mrf.mxu0
    %v990 = vadd.f32 %v174, %v989
    %v991 = vpop.f32.mrf.mxu0
    %992 = vmatprep.mubr.bf16.mxu0 0
    %993 = vmatmul.mubr.bf16.gmra.mxu0 %v476
    %v994 = vpop.f32.mrf.mxu0
    %v995 = vadd.f32 %v174, %v994
    %v996 = vpop.f32.mrf.mxu0
    %v997 = vpop.f32.mrf.mxu0
    %v998 = vadd.f32 %v174, %v997
    %v999 = vpop.f32.mrf.mxu0
    %1000 = vmatprep.mubr.bf16.mxu0 0
    %1001 = vmatmul.mubr.bf16.gmra.mxu0 %v477
    %v1002 = vpop.f32.mrf.mxu0
    %v1003 = vadd.f32 %v174, %v1002
    %v1004 = vpop.f32.mrf.mxu0
    %v1005 = vpop.f32.mrf.mxu0
    %v1006 = vadd.f32 %v174, %v1005
    %v1007 = vpop.f32.mrf.mxu0
    %1008 = vmatprep.mubr.bf16.mxu0 0
    %1009 = vmatmul.mubr.bf16.gmra.mxu0 %v478
    %v1010 = vpop.f32.mrf.mxu0
    %v1011 = vadd.f32 %v174, %v1010
    %v1012 = vpop.f32.mrf.mxu0
    %v1013 = vpop.f32.mrf.mxu0
    %v1014 = vadd.f32 %v174, %v1013
    %v1015 = vpop.f32.mrf.mxu0
    %1016 = vmatprep.mubr.bf16.mxu0 0
    %1017 = vmatmul.mubr.bf16.gmra.mxu0 %v479
    %v1018 = vpop.f32.mrf.mxu0
    %v1019 = vadd.f32 %v174, %v1018
    %v1020 = vpop.f32.mrf.mxu0
    %v1021 = vpop.f32.mrf.mxu0
    %v1022 = vadd.f32 %v174, %v1021
    %v1023 = vpop.f32.mrf.mxu0
    %1024 = vmatprep.mubr.bf16.mxu0 0
    %1025 = vmatmul.mubr.bf16.gmra.mxu0 %v480
    %v1026 = vpop.f32.mrf.mxu0
    %v1027 = vadd.f32 %v174, %v1026
    %v1028 = vpop.f32.mrf.mxu0
    %v1029 = vpop.f32.mrf.mxu0
    %v1030 = vadd.f32 %v174, %v1029
    %v1031 = vpop.f32.mrf.mxu0
    %1032 = vmatprep.mubr.bf16.mxu0 0
    %1033 = vmatmul.mubr.bf16.gmra.mxu0 %v481
    %v1034 = vpop.f32.mrf.mxu0
    %v1035 = vadd.f32 %v174, %v1034
    %v1036 = vpop.f32.mrf.mxu0
    %v1037 = vpop.f32.mrf.mxu0
    %v1038 = vadd.f32 %v174, %v1037
    %v1039 = vpop.f32.mrf.mxu0
    %1040 = vmatprep.mubr.bf16.mxu0 0
    %1041 = vmatmul.mubr.bf16.gmra.mxu0 %v482
    %v1042 = vpop.f32.mrf.mxu0
    %v1043 = vadd.f32 %v174, %v1042
    %v1044 = vpop.f32.mrf.mxu0
    %v1045 = vpop.f32.mrf.mxu0
    %v1046 = vadd.f32 %v174, %v1045
    %v1047 = vpop.f32.mrf.mxu0
    %1048 = vmatprep.mubr.bf16.mxu0 0
    %1049 = vmatmul.mubr.bf16.gmra.mxu0 %v483
    %v1050 = vpop.f32.mrf.mxu0
    %v1051 = vadd.f32 %v174, %v1050
    %v1052 = vpop.f32.mrf.mxu0
    %v1053 = vpop.f32.mrf.mxu0
    %v1054 = vadd.f32 %v174, %v1053
    %v1055 = vpop.f32.mrf.mxu0
    %1056 = vmatprep.mubr.bf16.mxu0 0
    %1057 = vmatmul.mubr.bf16.gmra.mxu0 %v484
    %v1058 = vpop.f32.mrf.mxu0
    %v1059 = vadd.f32 %v174, %v1058
    %v1060 = vpop.f32.mrf.mxu0
    %v1061 = vpop.f32.mrf.mxu0
    %v1062 = vadd.f32 %v174, %v1061
    %v1063 = vpop.f32.mrf.mxu0
    %1064 = vmatprep.mubr.bf16.mxu0 0
    %1065 = vmatmul.mubr.bf16.gmra.mxu0 %v485
    %v1066 = vpop.f32.mrf.mxu0
    %v1067 = vadd.f32 %v174, %v1066
    %v1068 = vpop.f32.mrf.mxu0
    %v1069 = vpop.f32.mrf.mxu0
    %v1070 = vadd.f32 %v174, %v1069
    %v1071 = vpop.f32.mrf.mxu0
    %1072 = vmatprep.mubr.bf16.mxu0 0
    %1073 = vmatmul.mubr.bf16.gmra.mxu0 %v486
    %v1074 = vpop.f32.mrf.mxu0
    %v1075 = vadd.f32 %v174, %v1074
    %v1076 = vpop.f32.mrf.mxu0
    %v1077 = vpop.f32.mrf.mxu0
    %v1078 = vadd.f32 %v174, %v1077
    %v1079 = vpop.f32.mrf.mxu0
    %1080 = vmatprep.mubr.bf16.mxu0 0
    %1081 = vmatmul.mubr.bf16.gmra.mxu0 %v487
    %v1082 = vpop.f32.mrf.mxu0
    %v1083 = vadd.f32 %v174, %v1082
    %v1084 = vpop.f32.mrf.mxu0
    %v1085 = vpop.f32.mrf.mxu0
    %v1086 = vadd.f32 %v174, %v1085
    %v1087 = vpop.f32.mrf.mxu0
    %1088 = vmatprep.mubr.bf16.mxu0 0
    %1089 = vmatmul.mubr.bf16.gmra.mxu0 %v488
    %v1090 = vpop.f32.mrf.mxu0
    %v1091 = vadd.f32 %v174, %v1090
    %v1092 = vpop.f32.mrf.mxu0
    %v1093 = vpop.f32.mrf.mxu0
    %v1094 = vadd.f32 %v174, %v1093
    %v1095 = vpop.f32.mrf.mxu0
    %1096 = vmatprep.mubr.bf16.mxu0 0
    %1097 = vmatmul.mubr.bf16.gmra.mxu0 %v489
    %v1098 = vpop.f32.mrf.mxu0
    %v1099 = vadd.f32 %v174, %v1098
    %v1100 = vpop.f32.mrf.mxu0
    %v1101 = vpop.f32.mrf.mxu0
    %v1102 = vadd.f32 %v174, %v1101
    %v1103 = vpop.f32.mrf.mxu0
    %1104 = vmatprep.mubr.bf16.mxu0 0
    %1105 = vmatmul.mubr.bf16.gmra.mxu0 %v490
    %v1106 = vpop.f32.mrf.mxu0
    %v1107 = vadd.f32 %v174, %v1106
    %v1108 = vpop.f32.mrf.mxu0
    %v1109 = vpop.f32.mrf.mxu0
    %v1110 = vadd.f32 %v174, %v1109
    %v1111 = vpop.f32.mrf.mxu0
    %1112 = vmatprep.mubr.bf16.mxu0 0
    %1113 = vmatmul.mubr.bf16.gmra.mxu0 %v491
    %v1114 = vpop.f32.mrf.mxu0
    %v1115 = vadd.f32 %v174, %v1114
    %v1116 = vpop.f32.mrf.mxu0
    %v1117 = vpop.f32.mrf.mxu0
    %v1118 = vadd.f32 %v174, %v1117
    %v1119 = vpop.f32.mrf.mxu0
    %1120 = vmatprep.mubr.bf16.mxu0 0
    %1121 = vmatmul.mubr.bf16.gmra.mxu0 %v492
    %v1122 = vpop.f32.mrf.mxu0
    %v1123 = vadd.f32 %v174, %v1122
    %v1124 = vpop.f32.mrf.mxu0
    %v1125 = vpop.f32.mrf.mxu0
    %v1126 = vadd.f32 %v174, %v1125
    %v1127 = vpop.f32.mrf.mxu0
    %1128 = vmatprep.mubr.bf16.mxu0 0
    %1129 = vmatmul.mubr.bf16.gmra.mxu0 %v493
    %v1130 = vpop.f32.mrf.mxu0
    %v1131 = vadd.f32 %v174, %v1130
    %v1132 = vpop.f32.mrf.mxu0
    %v1133 = vpop.f32.mrf.mxu0
    %v1134 = vadd.f32 %v174, %v1133
    %v1135 = vpop.f32.mrf.mxu0
    %1136 = vmatprep.mubr.bf16.mxu0 0
    %1137 = vmatmul.mubr.bf16.gmra.mxu0 %v494
    %v1138 = vpop.f32.mrf.mxu0
    %v1139 = vadd.f32 %v174, %v1138
    %v1140 = vpop.f32.mrf.mxu0
    %v1141 = vpop.f32.mrf.mxu0
    %v1142 = vadd.f32 %v174, %v1141
    %v1143 = vpop.f32.mrf.mxu0
    %1144 = vmatprep.mubr.bf16.mxu0 0
    %1145 = vmatmul.mubr.bf16.gmra.mxu0 %v495
    %v1146 = vpop.f32.mrf.mxu0
    %v1147 = vadd.f32 %v174, %v1146
    %v1148 = vpop.f32.mrf.mxu0
    %v1149 = vpop.f32.mrf.mxu0
    %v1150 = vadd.f32 %v174, %v1149
    %v1151 = vpop.f32.mrf.mxu0
    %1152 = vdwg.mxu0
    %v1153 = vmax.f32 %v643, 0.0
    %v1154 = vmax.f32 %v646, 0.0
    %v1155 = vmax.f32 %v651, 0.0
    %v1156 = vmax.f32 %v654, 0.0
    %v1157 = vmax.f32 %v659, 0.0
    %v1158 = vmax.f32 %v662, 0.0
    %v1159 = vmax.f32 %v667, 0.0
    %v1160 = vmax.f32 %v670, 0.0
    %v1161 = vmax.f32 %v675, 0.0
    %v1162 = vmax.f32 %v678, 0.0
    %v1163 = vmax.f32 %v683, 0.0
    %v1164 = vmax.f32 %v686, 0.0
    %v1165 = vmax.f32 %v691, 0.0
    %v1166 = vmax.f32 %v694, 0.0
    %v1167 = vmax.f32 %v699, 0.0
    %v1168 = vmax.f32 %v702, 0.0
    %v1169 = vmax.f32 %v707, 0.0
    %v1170 = vmax.f32 %v710, 0.0
    %v1171 = vmax.f32 %v715, 0.0
    %v1172 = vmax.f32 %v718, 0.0
    %v1173 = vmax.f32 %v723, 0.0
    %v1174 = vmax.f32 %v726, 0.0
    %v1175 = vmax.f32 %v731, 0.0
    %v1176 = vmax.f32 %v734, 0.0
    %v1177 = vmax.f32 %v739, 0.0
    %v1178 = vmax.f32 %v742, 0.0
    %v1179 = vmax.f32 %v747, 0.0
    %v1180 = vmax.f32 %v750, 0.0
    %v1181 = vmax.f32 %v755, 0.0
    %v1182 = vmax.f32 %v758, 0.0
    %v1183 = vmax.f32 %v763, 0.0
    %v1184 = vmax.f32 %v766, 0.0
    %v1185 = vmax.f32 %v771, 0.0
    %v1186 = vmax.f32 %v774, 0.0
    %v1187 = vmax.f32 %v779, 0.0
    %v1188 = vmax.f32 %v782, 0.0
    %v1189 = vmax.f32 %v787, 0.0
    %v1190 = vmax.f32 %v790, 0.0
    %v1191 = vmax.f32 %v795, 0.0
    %v1192 = vmax.f32 %v798, 0.0
    %v1193 = vmax.f32 %v803, 0.0
    %v1194 = vmax.f32 %v806, 0.0
    %v1195 = vmax.f32 %v811, 0.0
    %v1196 = vmax.f32 %v814, 0.0
    %v1197 = vmax.f32 %v819, 0.0
    %v1198 = vmax.f32 %v822, 0.0
    %v1199 = vmax.f32 %v827, 0.0
    %v1200 = vmax.f32 %v830, 0.0
    %v1201 = vmax.f32 %v835, 0.0
    %v1202 = vmax.f32 %v838, 0.0
    %v1203 = vmax.f32 %v843, 0.0
    %v1204 = vmax.f32 %v846, 0.0
    %v1205 = vmax.f32 %v851, 0.0
    %v1206 = vmax.f32 %v854, 0.0
    %v1207 = vmax.f32 %v859, 0.0
    %v1208 = vmax.f32 %v862, 0.0
    %v1209 = vmax.f32 %v867, 0.0
    %v1210 = vmax.f32 %v870, 0.0
    %v1211 = vmax.f32 %v875, 0.0
    %v1212 = vmax.f32 %v878, 0.0
    %v1213 = vmax.f32 %v883, 0.0
    %v1214 = vmax.f32 %v886, 0.0
    %v1215 = vmax.f32 %v891, 0.0
    %v1216 = vmax.f32 %v894, 0.0
    %v1217 = vmax.f32 %v899, 0.0
    %v1218 = vmax.f32 %v902, 0.0
    %v1219 = vmax.f32 %v907, 0.0
    %v1220 = vmax.f32 %v910, 0.0
    %v1221 = vmax.f32 %v915, 0.0
    %v1222 = vmax.f32 %v918, 0.0
    %v1223 = vmax.f32 %v923, 0.0
    %v1224 = vmax.f32 %v926, 0.0
    %v1225 = vmax.f32 %v931, 0.0
    %v1226 = vmax.f32 %v934, 0.0
    %v1227 = vmax.f32 %v939, 0.0
    %v1228 = vmax.f32 %v942, 0.0
    %v1229 = vmax.f32 %v947, 0.0
    %v1230 = vmax.f32 %v950, 0.0
    %v1231 = vmax.f32 %v955, 0.0
    %v1232 = vmax.f32 %v958, 0.0
    %v1233 = vmax.f32 %v963, 0.0
    %v1234 = vmax.f32 %v966, 0.0
    %v1235 = vmax.f32 %v971, 0.0
    %v1236 = vmax.f32 %v974, 0.0
    %v1237 = vmax.f32 %v979, 0.0
    %v1238 = vmax.f32 %v982, 0.0
    %v1239 = vmax.f32 %v987, 0.0
    %v1240 = vmax.f32 %v990, 0.0
    %v1241 = vmax.f32 %v995, 0.0
    %v1242 = vmax.f32 %v998, 0.0
    %v1243 = vmax.f32 %v1003, 0.0
    %v1244 = vmax.f32 %v1006, 0.0
    %v1245 = vmax.f32 %v1011, 0.0
    %v1246 = vmax.f32 %v1014, 0.0
    %v1247 = vmax.f32 %v1019, 0.0
    %v1248 = vmax.f32 %v1022, 0.0
    %v1249 = vmax.f32 %v1027, 0.0
    %v1250 = vmax.f32 %v1030, 0.0
    %v1251 = vmax.f32 %v1035, 0.0
    %v1252 = vmax.f32 %v1038, 0.0
    %v1253 = vmax.f32 %v1043, 0.0
    %v1254 = vmax.f32 %v1046, 0.0
    %v1255 = vmax.f32 %v1051, 0.0
    %v1256 = vmax.f32 %v1054, 0.0
    %v1257 = vmax.f32 %v1059, 0.0
    %v1258 = vmax.f32 %v1062, 0.0
    %v1259 = vmax.f32 %v1067, 0.0
    %v1260 = vmax.f32 %v1070, 0.0
    %v1261 = vmax.f32 %v1075, 0.0
    %v1262 = vmax.f32 %v1078, 0.0
    %v1263 = vmax.f32 %v1083, 0.0
    %v1264 = vmax.f32 %v1086, 0.0
    %v1265 = vmax.f32 %v1091, 0.0
    %v1266 = vmax.f32 %v1094, 0.0
    %v1267 = vmax.f32 %v1099, 0.0
    %v1268 = vmax.f32 %v1102, 0.0
    %v1269 = vmax.f32 %v1107, 0.0
    %v1270 = vmax.f32 %v1110, 0.0
    %v1271 = vmax.f32 %v1115, 0.0
    %v1272 = vmax.f32 %v1118, 0.0
    %v1273 = vmax.f32 %v1123, 0.0
    %v1274 = vmax.f32 %v1126, 0.0
    %v1275 = vmax.f32 %v1131, 0.0
    %v1276 = vmax.f32 %v1134, 0.0
    %v1277 = vmax.f32 %v1139, 0.0
    %v1278 = vmax.f32 %v1142, 0.0
    %v1279 = vmax.f32 %v1147, 0.0
    %v1280 = vmax.f32 %v1150, 0.0
    %v1281 = vpack.c.bf16 %v1154, %v1153
    %v1282 = vpack.c.bf16 %v1156, %v1155
    %v1283 = vpack.c.bf16 %v1158, %v1157
    %v1284 = vpack.c.bf16 %v1160, %v1159
    %v1285 = vpack.c.bf16 %v1162, %v1161
    %v1286 = vpack.c.bf16 %v1164, %v1163
    %v1287 = vpack.c.bf16 %v1166, %v1165
    %v1288 = vpack.c.bf16 %v1168, %v1167
    %v1289 = vpack.c.bf16 %v1170, %v1169
    %v1290 = vpack.c.bf16 %v1172, %v1171
    %v1291 = vpack.c.bf16 %v1174, %v1173
    %v1292 = vpack.c.bf16 %v1176, %v1175
    %v1293 = vpack.c.bf16 %v1178, %v1177
    %v1294 = vpack.c.bf16 %v1180, %v1179
    %v1295 = vpack.c.bf16 %v1182, %v1181
    %v1296 = vpack.c.bf16 %v1184, %v1183
    %v1297 = vpack.c.bf16 %v1186, %v1185
    %v1298 = vpack.c.bf16 %v1188, %v1187
    %v1299 = vpack.c.bf16 %v1190, %v1189
    %v1300 = vpack.c.bf16 %v1192, %v1191
    %v1301 = vpack.c.bf16 %v1194, %v1193
    %v1302 = vpack.c.bf16 %v1196, %v1195
    %v1303 = vpack.c.bf16 %v1198, %v1197
    %v1304 = vpack.c.bf16 %v1200, %v1199
    %v1305 = vpack.c.bf16 %v1202, %v1201
    %v1306 = vpack.c.bf16 %v1204, %v1203
    %v1307 = vpack.c.bf16 %v1206, %v1205
    %v1308 = vpack.c.bf16 %v1208, %v1207
    %v1309 = vpack.c.bf16 %v1210, %v1209
    %v1310 = vpack.c.bf16 %v1212, %v1211
    %v1311 = vpack.c.bf16 %v1214, %v1213
    %v1312 = vpack.c.bf16 %v1216, %v1215
    %v1313 = vpack.c.bf16 %v1218, %v1217
    %v1314 = vpack.c.bf16 %v1220, %v1219
    %v1315 = vpack.c.bf16 %v1222, %v1221
    %v1316 = vpack.c.bf16 %v1224, %v1223
    %v1317 = vpack.c.bf16 %v1226, %v1225
    %v1318 = vpack.c.bf16 %v1228, %v1227
    %v1319 = vpack.c.bf16 %v1230, %v1229
    %v1320 = vpack.c.bf16 %v1232, %v1231
    %v1321 = vpack.c.bf16 %v1234, %v1233
    %v1322 = vpack.c.bf16 %v1236, %v1235
    %v1323 = vpack.c.bf16 %v1238, %v1237
    %v1324 = vpack.c.bf16 %v1240, %v1239
    %v1325 = vpack.c.bf16 %v1242, %v1241
    %v1326 = vpack.c.bf16 %v1244, %v1243
    %v1327 = vpack.c.bf16 %v1246, %v1245
    %v1328 = vpack.c.bf16 %v1248, %v1247
    %v1329 = vpack.c.bf16 %v1250, %v1249
    %v1330 = vpack.c.bf16 %v1252, %v1251
    %v1331 = vpack.c.bf16 %v1254, %v1253
    %v1332 = vpack.c.bf16 %v1256, %v1255
    %v1333 = vpack.c.bf16 %v1258, %v1257
    %v1334 = vpack.c.bf16 %v1260, %v1259
    %v1335 = vpack.c.bf16 %v1262, %v1261
    %v1336 = vpack.c.bf16 %v1264, %v1263
    %v1337 = vpack.c.bf16 %v1266, %v1265
    %v1338 = vpack.c.bf16 %v1268, %v1267
    %v1339 = vpack.c.bf16 %v1270, %v1269
    %v1340 = vpack.c.bf16 %v1272, %v1271
    %v1341 = vpack.c.bf16 %v1274, %v1273
    %v1342 = vpack.c.bf16 %v1276, %v1275
    %v1343 = vpack.c.bf16 %v1278, %v1277
    %v1344 = vpack.c.bf16 %v1280, %v1279
    %v1345 = vld [vmem:[%s3] sm:$0xff]
    %v1346 = vld [vmem:[%s3 + $0x8] sm:$0xff]
    %v1349 = vcombine.high %v1345, %v1345
    %v1351 = vunpack.c.l.s4 1983009808
    %v1352 = vunpack.c.0.s8 %v1351
    %v1353 = vlaneseq
    %v1354 = vshrl.u32 %v1353, 7
    %v1355 = vsub.s32 %v1352, %v1354
    %v1356 = vrot.slane %v1345, %v1355
    %v1358 = vunpack.c.l.s4 1983009808
    %v1359 = vunpack.c.0.s8 %v1358
    %v1360 = vlaneseq
    %v1361 = vshrl.u32 %v1360, 7
    %v1362 = vsub.s32 %v1359, %v1361
    %v1363 = vrot.slane %v1349, %v1362
    %v1364 = vcombine.high %v1356, %v1356
    %v1365 = vcombine.high %v1363, %v1363
    %v1366 = vcombine.high %v1346, %v1346
    %v1368 = vunpack.c.l.s4 1983009808
    %v1369 = vunpack.c.0.s8 %v1368
    %v1370 = vlaneseq
    %v1371 = vshrl.u32 %v1370, 7
    %v1372 = vsub.s32 %v1369, %v1371
    %v1373 = vrot.slane %v1346, %v1372
    %v1375 = vunpack.c.l.s4 1983009808
    %v1376 = vunpack.c.0.s8 %v1375
    %v1377 = vlaneseq
    %v1378 = vshrl.u32 %v1377, 7
    %v1379 = vsub.s32 %v1376, %v1378
    %v1380 = vrot.slane %v1366, %v1379
    %v1381 = vcombine.high %v1373, %v1373
    %v1382 = vcombine.high %v1380, %v1380
    %1391 = vmatprep.subr.bf16.mxu0 0
    %1392 = vmatpush1.bf16.msra.mxu0 %v1288
    %1393 = vmatprep.subr.bf16.mxu0 0
    %1394 = vmatpush1.bf16.msra.mxu0 %v1287
    %1395 = vmatprep.subr.bf16.mxu0 0
    %1396 = vmatpush1.bf16.msra.mxu0 %v1286
    %1397 = vmatprep.subr.bf16.mxu0 0
    %1398 = vmatpush1.bf16.msra.mxu0 %v1285
    %1399 = vmatprep.subr.bf16.mxu0 0
    %1400 = vmatpush1.bf16.msra.mxu0 %v1284
    %1401 = vmatprep.subr.bf16.mxu0 0
    %1402 = vmatpush1.bf16.msra.mxu0 %v1283
    %1403 = vmatprep.subr.bf16.mxu0 0
    %1404 = vmatpush1.bf16.msra.mxu0 %v1282
    %1405 = vmatprep.subr.bf16.mxu0 0
    %1406 = vmatpush1.bf16.msra.mxu0 %v1281
    %1407 = vmatprep.subr.bf16.mxu0 0
    %1408 = vmatpush2.bf16.msra.mxu0 %v1296
    %1409 = vmatprep.subr.bf16.mxu0 0
    %1410 = vmatpush2.bf16.msra.mxu0 %v1295
    %1411 = vmatprep.subr.bf16.mxu0 0
    %1412 = vmatpush2.bf16.msra.mxu0 %v1294
    %1413 = vmatprep.subr.bf16.mxu0 0
    %1414 = vmatpush2.bf16.msra.mxu0 %v1293
    %1415 = vmatprep.subr.bf16.mxu0 0
    %1416 = vmatpush2.bf16.msra.mxu0 %v1292
    %1417 = vmatprep.subr.bf16.mxu0 0
    %1418 = vmatpush2.bf16.msra.mxu0 %v1291
    %1419 = vmatprep.subr.bf16.mxu0 0
    %1420 = vmatpush2.bf16.msra.mxu0 %v1290
    %1421 = vmatprep.subr.bf16.mxu0 0
    %1422 = vmatpush2.bf16.msra.mxu0 %v1289
    %1423 = vmatprep.mubr.bf16.mxu0 %v1364
    %1424 = vmatmul.mubr.bf16.gmra.mxu0 %v1356
    %v1425 = vpop.f32.mrf.mxu0
    %v1426 = vadd.f32 0.0, %v1425
    %v1427 = vpop.f32.mrf.mxu0
    %v1428 = vpop.f32.mrf.mxu0
    %v1429 = vpop.f32.mrf.mxu0
    %1430 = vdwg.mxu0
    %1431 = vmatprep.subr.bf16.mxu0 0
    %1432 = vmatpush1.bf16.msra.mxu0 %v1304
    %1433 = vmatprep.subr.bf16.mxu0 0
    %1434 = vmatpush1.bf16.msra.mxu0 %v1303
    %1435 = vmatprep.subr.bf16.mxu0 0
    %1436 = vmatpush1.bf16.msra.mxu0 %v1302
    %1437 = vmatprep.subr.bf16.mxu0 0
    %1438 = vmatpush1.bf16.msra.mxu0 %v1301
    %1439 = vmatprep.subr.bf16.mxu0 0
    %1440 = vmatpush1.bf16.msra.mxu0 %v1300
    %1441 = vmatprep.subr.bf16.mxu0 0
    %1442 = vmatpush1.bf16.msra.mxu0 %v1299
    %1443 = vmatprep.subr.bf16.mxu0 0
    %1444 = vmatpush1.bf16.msra.mxu0 %v1298
    %1445 = vmatprep.subr.bf16.mxu0 0
    %1446 = vmatpush1.bf16.msra.mxu0 %v1297
    %1447 = vmatprep.subr.bf16.mxu0 0
    %1448 = vmatpush2.bf16.msra.mxu0 %v1312
    %1449 = vmatprep.subr.bf16.mxu0 0
    %1450 = vmatpush2.bf16.msra.mxu0 %v1311
    %1451 = vmatprep.subr.bf16.mxu0 0
    %1452 = vmatpush2.bf16.msra.mxu0 %v1310
    %1453 = vmatprep.subr.bf16.mxu0 0
    %1454 = vmatpush2.bf16.msra.mxu0 %v1309
    %1455 = vmatprep.subr.bf16.mxu0 0
    %1456 = vmatpush2.bf16.msra.mxu0 %v1308
    %1457 = vmatprep.subr.bf16.mxu0 0
    %1458 = vmatpush2.bf16.msra.mxu0 %v1307
    %1459 = vmatprep.subr.bf16.mxu0 0
    %1460 = vmatpush2.bf16.msra.mxu0 %v1306
    %1461 = vmatprep.subr.bf16.mxu0 0
    %1462 = vmatpush2.bf16.msra.mxu0 %v1305
    %1463 = vmatprep.mubr.bf16.mxu0 %v1365
    %1464 = vmatmul.mubr.bf16.gmra.mxu0 %v1363
    %v1465 = vpop.f32.mrf.mxu0
    %v1466 = vadd.f32 %v1426, %v1465
    %v1467 = vpop.f32.mrf.mxu0
    %v1468 = vpop.f32.mrf.mxu0
    %v1469 = vpop.f32.mrf.mxu0
    %1470 = vdwg.mxu0
    %1471 = vmatprep.subr.bf16.mxu0 0
    %1472 = vmatpush1.bf16.msra.mxu0 %v1320
    %1473 = vmatprep.subr.bf16.mxu0 0
    %1474 = vmatpush1.bf16.msra.mxu0 %v1319
    %1475 = vmatprep.subr.bf16.mxu0 0
    %1476 = vmatpush1.bf16.msra.mxu0 %v1318
    %1477 = vmatprep.subr.bf16.mxu0 0
    %1478 = vmatpush1.bf16.msra.mxu0 %v1317
    %1479 = vmatprep.subr.bf16.mxu0 0
    %1480 = vmatpush1.bf16.msra.mxu0 %v1316
    %1481 = vmatprep.subr.bf16.mxu0 0
    %1482 = vmatpush1.bf16.msra.mxu0 %v1315
    %1483 = vmatprep.subr.bf16.mxu0 0
    %1484 = vmatpush1.bf16.msra.mxu0 %v1314
    %1485 = vmatprep.subr.bf16.mxu0 0
    %1486 = vmatpush1.bf16.msra.mxu0 %v1313
    %1487 = vmatprep.subr.bf16.mxu0 0
    %1488 = vmatpush2.bf16.msra.mxu0 %v1328
    %1489 = vmatprep.subr.bf16.mxu0 0
    %1490 = vmatpush2.bf16.msra.mxu0 %v1327
    %1491 = vmatprep.subr.bf16.mxu0 0
    %1492 = vmatpush2.bf16.msra.mxu0 %v1326
    %1493 = vmatprep.subr.bf16.mxu0 0
    %1494 = vmatpush2.bf16.msra.mxu0 %v1325
    %1495 = vmatprep.subr.bf16.mxu0 0
    %1496 = vmatpush2.bf16.msra.mxu0 %v1324
    %1497 = vmatprep.subr.bf16.mxu0 0
    %1498 = vmatpush2.bf16.msra.mxu0 %v1323
    %1499 = vmatprep.subr.bf16.mxu0 0
    %1500 = vmatpush2.bf16.msra.mxu0 %v1322
    %1501 = vmatprep.subr.bf16.mxu0 0
    %1502 = vmatpush2.bf16.msra.mxu0 %v1321
    %1503 = vmatprep.mubr.bf16.mxu0 %v1381
    %1504 = vmatmul.mubr.bf16.gmra.mxu0 %v1373
    %v1505 = vpop.f32.mrf.mxu0
    %v1506 = vadd.f32 %v1466, %v1505
    %v1507 = vpop.f32.mrf.mxu0
    %v1508 = vpop.f32.mrf.mxu0
    %v1509 = vpop.f32.mrf.mxu0
    %1510 = vdwg.mxu0
    %1511 = vmatprep.subr.bf16.mxu0 0
    %1512 = vmatpush1.bf16.msra.mxu0 %v1336
    %1513 = vmatprep.subr.bf16.mxu0 0
    %1514 = vmatpush1.bf16.msra.mxu0 %v1335
    %1515 = vmatprep.subr.bf16.mxu0 0
    %1516 = vmatpush1.bf16.msra.mxu0 %v1334
    %1517 = vmatprep.subr.bf16.mxu0 0
    %1518 = vmatpush1.bf16.msra.mxu0 %v1333
    %1519 = vmatprep.subr.bf16.mxu0 0
    %1520 = vmatpush1.bf16.msra.mxu0 %v1332
    %1521 = vmatprep.subr.bf16.mxu0 0
    %1522 = vmatpush1.bf16.msra.mxu0 %v1331
    %1523 = vmatprep.subr.bf16.mxu0 0
    %1524 = vmatpush1.bf16.msra.mxu0 %v1330
    %1525 = vmatprep.subr.bf16.mxu0 0
    %1526 = vmatpush1.bf16.msra.mxu0 %v1329
    %1527 = vmatprep.subr.bf16.mxu0 0
    %1528 = vmatpush2.bf16.msra.mxu0 %v1344
    %1529 = vmatprep.subr.bf16.mxu0 0
    %1530 = vmatpush2.bf16.msra.mxu0 %v1343
    %1531 = vmatprep.subr.bf16.mxu0 0
    %1532 = vmatpush2.bf16.msra.mxu0 %v1342
    %1533 = vmatprep.subr.bf16.mxu0 0
    %1534 = vmatpush2.bf16.msra.mxu0 %v1341
    %1535 = vmatprep.subr.bf16.mxu0 0
    %1536 = vmatpush2.bf16.msra.mxu0 %v1340
    %1537 = vmatprep.subr.bf16.mxu0 0
    %1538 = vmatpush2.bf16.msra.mxu0 %v1339
    %1539 = vmatprep.subr.bf16.mxu0 0
    %1540 = vmatpush2.bf16.msra.mxu0 %v1338
    %1541 = vmatprep.subr.bf16.mxu0 0
    %1542 = vmatpush2.bf16.msra.mxu0 %v1337
    %1543 = vmatprep.mubr.bf16.mxu0 %v1382
    %1544 = vmatmul.mubr.bf16.gmra.mxu0 %v1380
    %v1545 = vpop.f32.mrf.mxu0
    %v1546 = vadd.f32 %v1506, %v1545
    %v1547 = vpop.f32.mrf.mxu0
    %v1548 = vpop.f32.mrf.mxu0
    %v1549 = vpop.f32.mrf.mxu0
    %1550 = vdwg.mxu0
    %v1551 = vld [vmem:[%s4] sm:$0xf]
    %v1552 = vld [vmem:[%s4 + $0x4] sm:$0xf]
    %v1553 = vld [vmem:[%s4 + $0x8] sm:$0xf]
    %v1554 = vld [vmem:[%s4 + $0xc] sm:$0xf]
    %v1555 = vld [vmem:[%s4 + $0x10] sm:$0xf]
    %v1556 = vld [vmem:[%s4 + $0x14] sm:$0xf]
    %v1557 = vld [vmem:[%s4 + $0x18] sm:$0xf]
    %v1558 = vld [vmem:[%s4 + $0x1c] sm:$0xf]
    %v1559 = vld [vmem:[%s4 + $0x20] sm:$0xf]
    %v1560 = vld [vmem:[%s4 + $0x24] sm:$0xf]
    %v1561 = vld [vmem:[%s4 + $0x28] sm:$0xf]
    %v1562 = vld [vmem:[%s4 + $0x2c] sm:$0xf]
    %v1563 = vld [vmem:[%s4 + $0x30] sm:$0xf]
    %v1564 = vld [vmem:[%s4 + $0x34] sm:$0xf]
    %v1565 = vld [vmem:[%s4 + $0x38] sm:$0xf]
    %v1566 = vld [vmem:[%s4 + $0x3c] sm:$0xf]
    %v1567 = vpack.c.bf16 %v1546, %v1546
    %v1568 = vld [vmem:[%s5] sm:$0x1]
    %v1569 = vlaneseq
    %v1570 = vshrl.u32 %v1569, 7
    %v1571 = vsub.s32 0, %v1570
    %v1572 = vrot.slane %v1568, %v1571
    %v1589 = vunpack.c.l.b16 %v1551
    %v1590 = vunpack.c.l.b16 %v1552
    %v1591 = vunpack.c.l.b16 %v1553
    %v1592 = vunpack.c.l.b16 %v1554
    %v1593 = vunpack.c.l.b16 %v1555
    %v1594 = vunpack.c.l.b16 %v1556
    %v1595 = vunpack.c.l.b16 %v1557
    %v1596 = vunpack.c.l.b16 %v1558
    %v1597 = vunpack.c.l.b16 %v1559
    %v1598 = vunpack.c.l.b16 %v1560
    %v1599 = vunpack.c.l.b16 %v1561
    %v1600 = vunpack.c.l.b16 %v1562
    %v1601 = vunpack.c.l.b16 %v1563
    %v1602 = vunpack.c.l.b16 %v1564
    %v1603 = vunpack.c.l.b16 %v1565
    %v1604 = vunpack.c.l.b16 %v1566
    %v1605 = vpack.c.b16 %v1590, %v1589
    %v1606 = vpack.c.b16 %v1592, %v1591
    %v1607 = vpack.c.b16 %v1594, %v1593
    %v1608 = vpack.c.b16 %v1596, %v1595
    %v1609 = vpack.c.b16 %v1598, %v1597
    %v1610 = vpack.c.b16 %v1600, %v1599
    %v1611 = vpack.c.b16 %v1602, %v1601
    %v1612 = vpack.c.b16 %v1604, %v1603
    %1621 = vmatprep.subr.bf16.mxu0 0
    %1622 = vmatpush1.bf16.msra.mxu0 %v1612
    %1623 = vmatprep.subr.bf16.mxu0 0
    %1624 = vmatpush1.bf16.msra.mxu0 %v1611
    %1625 = vmatprep.subr.bf16.mxu0 0
    %1626 = vmatpush1.bf16.msra.mxu0 %v1610
    %1627 = vmatprep.subr.bf16.mxu0 0
    %1628 = vmatpush1.bf16.msra.mxu0 %v1609
    %1629 = vmatprep.subr.bf16.mxu0 0
    %1630 = vmatpush1.bf16.msra.mxu0 %v1608
    %1631 = vmatprep.subr.bf16.mxu0 0
    %1632 = vmatpush1.bf16.msra.mxu0 %v1607
    %1633 = vmatprep.subr.bf16.mxu0 0
    %1634 = vmatpush1.bf16.msra.mxu0 %v1606
    %1635 = vmatprep.subr.bf16.mxu0 0
    %1636 = vmatpush1.bf16.msra.mxu0 %v1605
    %1637 = vmatprep.subr.bf16.mxu0 0
    %1638 = vmatpush2.bf16.msra.mxu0 0
    %1639 = vmatprep.subr.bf16.mxu0 0
    %1640 = vmatpush2.bf16.msra.mxu0 0
    %1641 = vmatprep.subr.bf16.mxu0 0
    %1642 = vmatpush2.bf16.msra.mxu0 0
    %1643 = vmatprep.subr.bf16.mxu0 0
    %1644 = vmatpush2.bf16.msra.mxu0 0
    %1645 = vmatprep.subr.bf16.mxu0 0
    %1646 = vmatpush2.bf16.msra.mxu0 0
    %1647 = vmatprep.subr.bf16.mxu0 0
    %1648 = vmatpush2.bf16.msra.mxu0 0
    %1649 = vmatprep.subr.bf16.mxu0 0
    %1650 = vmatpush2.bf16.msra.mxu0 0
    %1651 = vmatprep.subr.bf16.mxu0 0
    %1652 = vmatpush2.bf16.msra.mxu0 0
    %1653 = vmatprep.mubr.bf16.mxu0 0
    %1654 = vmatmul.mubr.bf16.gmra.mxu0 %v1567
    %v1655 = vpop.f32.mrf.mxu0
    %v1656 = vadd.f32 %v1572, %v1655
    %v1657 = vpop.f32.mrf.mxu0
    %v1658 = vpop.f32.mrf.mxu0
    %v1659 = vpop.f32.mrf.mxu0
    %1660 = vdwg.mxu0
    %v1661 = vmax.f32 %v1656, 0.0
    %v1662 = vld [vmem:[%s4 + $0x40] sm:$0xf]
    %v1663 = vld [vmem:[%s4 + $0x44] sm:$0xf]
    %v1664 = vld [vmem:[%s4 + $0x48] sm:$0xf]
    %v1665 = vld [vmem:[%s4 + $0x4c] sm:$0xf]
    %v1666 = vld [vmem:[%s4 + $0x50] sm:$0xf]
    %v1667 = vld [vmem:[%s4 + $0x54] sm:$0xf]
    %v1668 = vld [vmem:[%s4 + $0x58] sm:$0xf]
    %v1669 = vld [vmem:[%s4 + $0x5c] sm:$0xf]
    %v1670 = vld [vmem:[%s4 + $0x60] sm:$0xf]
    %v1671 = vld [vmem:[%s4 + $0x64] sm:$0xf]
    %v1672 = vld [vmem:[%s4 + $0x68] sm:$0xf]
    %v1673 = vld [vmem:[%s4 + $0x6c] sm:$0xf]
    %v1674 = vld [vmem:[%s4 + $0x70] sm:$0xf]
    %v1675 = vld [vmem:[%s4 + $0x74] sm:$0xf]
    %v1676 = vld [vmem:[%s4 + $0x78] sm:$0xf]
    %v1677 = vld [vmem:[%s4 + $0x7c] sm:$0xf]
    %v1678 = vpack.c.bf16 %v1661, %v1661
    %v1679 = vld [vmem:[%s5 + $0x1] sm:$0x1]
    %v1680 = vlaneseq
    %v1681 = vshrl.u32 %v1680, 7
    %v1682 = vsub.s32 0, %v1681
    %v1683 = vrot.slane %v1679, %v1682
    %v1700 = vunpack.c.l.b16 %v1662
    %v1701 = vunpack.c.l.b16 %v1663
    %v1702 = vunpack.c.l.b16 %v1664
    %v1703 = vunpack.c.l.b16 %v1665
    %v1704 = vunpack.c.l.b16 %v1666
    %v1705 = vunpack.c.l.b16 %v1667
    %v1706 = vunpack.c.l.b16 %v1668
    %v1707 = vunpack.c.l.b16 %v1669
    %v1708 = vunpack.c.l.b16 %v1670
    %v1709 = vunpack.c.l.b16 %v1671
    %v1710 = vunpack.c.l.b16 %v1672
    %v1711 = vunpack.c.l.b16 %v1673
    %v1712 = vunpack.c.l.b16 %v1674
    %v1713 = vunpack.c.l.b16 %v1675
    %v1714 = vunpack.c.l.b16 %v1676
    %v1715 = vunpack.c.l.b16 %v1677
    %v1716 = vpack.c.b16 %v1701, %v1700
    %v1717 = vpack.c.b16 %v1703, %v1702
    %v1718 = vpack.c.b16 %v1705, %v1704
    %v1719 = vpack.c.b16 %v1707, %v1706
    %v1720 = vpack.c.b16 %v1709, %v1708
    %v1721 = vpack.c.b16 %v1711, %v1710
    %v1722 = vpack.c.b16 %v1713, %v1712
    %v1723 = vpack.c.b16 %v1715, %v1714
    %1732 = vmatprep.subr.bf16.mxu0 0
    %1733 = vmatpush1.bf16.msra.mxu0 %v1723
    %1734 = vmatprep.subr.bf16.mxu0 0
    %1735 = vmatpush1.bf16.msra.mxu0 %v1722
    %1736 = vmatprep.subr.bf16.mxu0 0
    %1737 = vmatpush1.bf16.msra.mxu0 %v1721
    %1738 = vmatprep.subr.bf16.mxu0 0
    %1739 = vmatpush1.bf16.msra.mxu0 %v1720
    %1740 = vmatprep.subr.bf16.mxu0 0
    %1741 = vmatpush1.bf16.msra.mxu0 %v1719
    %1742 = vmatprep.subr.bf16.mxu0 0
    %1743 = vmatpush1.bf16.msra.mxu0 %v1718
    %1744 = vmatprep.subr.bf16.mxu0 0
    %1745 = vmatpush1.bf16.msra.mxu0 %v1717
    %1746 = vmatprep.subr.bf16.mxu0 0
    %1747 = vmatpush1.bf16.msra.mxu0 %v1716
    %1748 = vmatprep.subr.bf16.mxu0 0
    %1749 = vmatpush2.bf16.msra.mxu0 0
    %1750 = vmatprep.subr.bf16.mxu0 0
    %1751 = vmatpush2.bf16.msra.mxu0 0
    %1752 = vmatprep.subr.bf16.mxu0 0
    %1753 = vmatpush2.bf16.msra.mxu0 0
    %1754 = vmatprep.subr.bf16.mxu0 0
    %1755 = vmatpush2.bf16.msra.mxu0 0
    %1756 = vmatprep.subr.bf16.mxu0 0
    %1757 = vmatpush2.bf16.msra.mxu0 0
    %1758 = vmatprep.subr.bf16.mxu0 0
    %1759 = vmatpush2.bf16.msra.mxu0 0
    %1760 = vmatprep.subr.bf16.mxu0 0
    %1761 = vmatpush2.bf16.msra.mxu0 0
    %1762 = vmatprep.subr.bf16.mxu0 0
    %1763 = vmatpush2.bf16.msra.mxu0 0
    %1764 = vmatprep.mubr.bf16.mxu0 0
    %1765 = vmatmul.mubr.bf16.gmra.mxu0 %v1678
    %v1766 = vpop.f32.mrf.mxu0
    %v1767 = vadd.f32 %v1683, %v1766
    %v1768 = vpop.f32.mrf.mxu0
    %v1769 = vpop.f32.mrf.mxu0
    %v1770 = vpop.f32.mrf.mxu0
    %1771 = vdwg.mxu0
    %v1772 = vld [vmem:[%s4 + $0x80] sm:$0xf]
    %v1773 = vld [vmem:[%s4 + $0x84] sm:$0xf]
    %v1774 = vld [vmem:[%s4 + $0x88] sm:$0xf]
    %v1775 = vld [vmem:[%s4 + $0x8c] sm:$0xf]
    %v1776 = vld [vmem:[%s4 + $0x90] sm:$0xf]
    %v1777 = vld [vmem:[%s4 + $0x94] sm:$0xf]
    %v1778 = vld [vmem:[%s4 + $0x98] sm:$0xf]
    %v1779 = vld [vmem:[%s4 + $0x9c] sm:$0xf]
    %v1780 = vld [vmem:[%s4 + $0xa0] sm:$0xf]
    %v1781 = vld [vmem:[%s4 + $0xa4] sm:$0xf]
    %v1782 = vld [vmem:[%s4 + $0xa8] sm:$0xf]
    %v1783 = vld [vmem:[%s4 + $0xac] sm:$0xf]
    %v1784 = vld [vmem:[%s4 + $0xb0] sm:$0xf]
    %v1785 = vld [vmem:[%s4 + $0xb4] sm:$0xf]
    %v1786 = vld [vmem:[%s4 + $0xb8] sm:$0xf]
    %v1787 = vld [vmem:[%s4 + $0xbc] sm:$0xf]
    %v1788 = vpack.c.bf16 %v1767, %v1767
    %v1789 = vld [vmem:[%s5 + $0x2] sm:$0x1]
    %v1790 = vlaneseq
    %v1791 = vshrl.u32 %v1790, 7
    %v1792 = vsub.s32 0, %v1791
    %v1793 = vrot.slane %v1789, %v1792
    %v1810 = vunpack.c.l.b16 %v1772
    %v1811 = vunpack.c.l.b16 %v1773
    %v1812 = vunpack.c.l.b16 %v1774
    %v1813 = vunpack.c.l.b16 %v1775
    %v1814 = vunpack.c.l.b16 %v1776
    %v1815 = vunpack.c.l.b16 %v1777
    %v1816 = vunpack.c.l.b16 %v1778
    %v1817 = vunpack.c.l.b16 %v1779
    %v1818 = vunpack.c.l.b16 %v1780
    %v1819 = vunpack.c.l.b16 %v1781
    %v1820 = vunpack.c.l.b16 %v1782
    %v1821 = vunpack.c.l.b16 %v1783
    %v1822 = vunpack.c.l.b16 %v1784
    %v1823 = vunpack.c.l.b16 %v1785
    %v1824 = vunpack.c.l.b16 %v1786
    %v1825 = vunpack.c.l.b16 %v1787
    %v1826 = vpack.c.b16 %v1811, %v1810
    %v1827 = vpack.c.b16 %v1813, %v1812
    %v1828 = vpack.c.b16 %v1815, %v1814
    %v1829 = vpack.c.b16 %v1817, %v1816
    %v1830 = vpack.c.b16 %v1819, %v1818
    %v1831 = vpack.c.b16 %v1821, %v1820
    %v1832 = vpack.c.b16 %v1823, %v1822
    %v1833 = vpack.c.b16 %v1825, %v1824
    %1842 = vmatprep.subr.bf16.mxu0 0
    %1843 = vmatpush1.bf16.msra.mxu0 %v1833
    %1844 = vmatprep.subr.bf16.mxu0 0
    %1845 = vmatpush1.bf16.msra.mxu0 %v1832
    %1846 = vmatprep.subr.bf16.mxu0 0
    %1847 = vmatpush1.bf16.msra.mxu0 %v1831
    %1848 = vmatprep.subr.bf16.mxu0 0
    %1849 = vmatpush1.bf16.msra.mxu0 %v1830
    %1850 = vmatprep.subr.bf16.mxu0 0
    %1851 = vmatpush1.bf16.msra.mxu0 %v1829
    %1852 = vmatprep.subr.bf16.mxu0 0
    %1853 = vmatpush1.bf16.msra.mxu0 %v1828
    %1854 = vmatprep.subr.bf16.mxu0 0
    %1855 = vmatpush1.bf16.msra.mxu0 %v1827
    %1856 = vmatprep.subr.bf16.mxu0 0
    %1857 = vmatpush1.bf16.msra.mxu0 %v1826
    %1858 = vmatprep.subr.bf16.mxu0 0
    %1859 = vmatpush2.bf16.msra.mxu0 0
    %1860 = vmatprep.subr.bf16.mxu0 0
    %1861 = vmatpush2.bf16.msra.mxu0 0
    %1862 = vmatprep.subr.bf16.mxu0 0
    %1863 = vmatpush2.bf16.msra.mxu0 0
    %1864 = vmatprep.subr.bf16.mxu0 0
    %1865 = vmatpush2.bf16.msra.mxu0 0
    %1866 = vmatprep.subr.bf16.mxu0 0
    %1867 = vmatpush2.bf16.msra.mxu0 0
    %1868 = vmatprep.subr.bf16.mxu0 0
    %1869 = vmatpush2.bf16.msra.mxu0 0
    %1870 = vmatprep.subr.bf16.mxu0 0
    %1871 = vmatpush2.bf16.msra.mxu0 0
    %1872 = vmatprep.subr.bf16.mxu0 0
    %1873 = vmatpush2.bf16.msra.mxu0 0
    %1874 = vmatprep.mubr.bf16.mxu0 0
    %1875 = vmatmul.mubr.bf16.gmra.mxu0 %v1788
    %v1876 = vpop.f32.mrf.mxu0
    %v1877 = vadd.f32 %v1793, %v1876
    %v1878 = vpop.f32.mrf.mxu0
    %v1879 = vpop.f32.mrf.mxu0
    %v1880 = vpop.f32.mrf.mxu0
    %1881 = vdwg.mxu0
    %v1882 = vmax.f32 %v1877, 0.0
    %v1883 = vld [vmem:[%s4 + $0xc0] sm:$0xf]
    %v1884 = vld [vmem:[%s4 + $0xc4] sm:$0xf]
    %v1885 = vld [vmem:[%s4 + $0xc8] sm:$0xf]
    %v1886 = vld [vmem:[%s4 + $0xcc] sm:$0xf]
    %v1887 = vld [vmem:[%s4 + $0xd0] sm:$0xf]
    %v1888 = vld [vmem:[%s4 + $0xd4] sm:$0xf]
    %v1889 = vld [vmem:[%s4 + $0xd8] sm:$0xf]
    %v1890 = vld [vmem:[%s4 + $0xdc] sm:$0xf]
    %v1891 = vld [vmem:[%s4 + $0xe0] sm:$0xf]
    %v1892 = vld [vmem:[%s4 + $0xe4] sm:$0xf]
    %v1893 = vld [vmem:[%s4 + $0xe8] sm:$0xf]
    %v1894 = vld [vmem:[%s4 + $0xec] sm:$0xf]
    %v1895 = vld [vmem:[%s4 + $0xf0] sm:$0xf]
    %v1896 = vld [vmem:[%s4 + $0xf4] sm:$0xf]
    %v1897 = vld [vmem:[%s4 + $0xf8] sm:$0xf]
    %v1898 = vld [vmem:[%s4 + $0xfc] sm:$0xf]
    %v1899 = vpack.c.bf16 %v1882, %v1882
    %v1900 = vld [vmem:[%s5 + $0x3] sm:$0x1]
    %v1901 = vlaneseq
    %v1902 = vshrl.u32 %v1901, 7
    %v1903 = vsub.s32 0, %v1902
    %v1904 = vrot.slane %v1900, %v1903
    %v1921 = vunpack.c.l.b16 %v1883
    %v1922 = vunpack.c.l.b16 %v1884
    %v1923 = vunpack.c.l.b16 %v1885
    %v1924 = vunpack.c.l.b16 %v1886
    %v1925 = vunpack.c.l.b16 %v1887
    %v1926 = vunpack.c.l.b16 %v1888
    %v1927 = vunpack.c.l.b16 %v1889
    %v1928 = vunpack.c.l.b16 %v1890
    %v1929 = vunpack.c.l.b16 %v1891
    %v1930 = vunpack.c.l.b16 %v1892
    %v1931 = vunpack.c.l.b16 %v1893
    %v1932 = vunpack.c.l.b16 %v1894
    %v1933 = vunpack.c.l.b16 %v1895
    %v1934 = vunpack.c.l.b16 %v1896
    %v1935 = vunpack.c.l.b16 %v1897
    %v1936 = vunpack.c.l.b16 %v1898
    %v1937 = vpack.c.b16 %v1922, %v1921
    %v1938 = vpack.c.b16 %v1924, %v1923
    %v1939 = vpack.c.b16 %v1926, %v1925
    %v1940 = vpack.c.b16 %v1928, %v1927
    %v1941 = vpack.c.b16 %v1930, %v1929
    %v1942 = vpack.c.b16 %v1932, %v1931
    %v1943 = vpack.c.b16 %v1934, %v1933
    %v1944 = vpack.c.b16 %v1936, %v1935
    %1953 = vmatprep.subr.bf16.mxu0 0
    %1954 = vmatpush1.bf16.msra.mxu0 %v1944
    %1955 = vmatprep.subr.bf16.mxu0 0
    %1956 = vmatpush1.bf16.msra.mxu0 %v1943
    %1957 = vmatprep.subr.bf16.mxu0 0
    %1958 = vmatpush1.bf16.msra.mxu0 %v1942
    %1959 = vmatprep.subr.bf16.mxu0 0
    %1960 = vmatpush1.bf16.msra.mxu0 %v1941
    %1961 = vmatprep.subr.bf16.mxu0 0
    %1962 = vmatpush1.bf16.msra.mxu0 %v1940
    %1963 = vmatprep.subr.bf16.mxu0 0
    %1964 = vmatpush1.bf16.msra.mxu0 %v1939
    %1965 = vmatprep.subr.bf16.mxu0 0
    %1966 = vmatpush1.bf16.msra.mxu0 %v1938
    %1967 = vmatprep.subr.bf16.mxu0 0
    %1968 = vmatpush1.bf16.msra.mxu0 %v1937
    %1969 = vmatprep.subr.bf16.mxu0 0
    %1970 = vmatpush2.bf16.msra.mxu0 0
    %1971 = vmatprep.subr.bf16.mxu0 0
    %1972 = vmatpush2.bf16.msra.mxu0 0
    %1973 = vmatprep.subr.bf16.mxu0 0
    %1974 = vmatpush2.bf16.msra.mxu0 0
    %1975 = vmatprep.subr.bf16.mxu0 0
    %1976 = vmatpush2.bf16.msra.mxu0 0
    %1977 = vmatprep.subr.bf16.mxu0 0
    %1978 = vmatpush2.bf16.msra.mxu0 0
    %1979 = vmatprep.subr.bf16.mxu0 0
    %1980 = vmatpush2.bf16.msra.mxu0 0
    %1981 = vmatprep.subr.bf16.mxu0 0
    %1982 = vmatpush2.bf16.msra.mxu0 0
    %1983 = vmatprep.subr.bf16.mxu0 0
    %1984 = vmatpush2.bf16.msra.mxu0 0
    %1985 = vmatprep.mubr.bf16.mxu0 0
    %1986 = vmatmul.mubr.bf16.gmra.mxu0 %v1899
    %v1987 = vpop.f32.mrf.mxu0
    %v1988 = vadd.f32 %v1904, %v1987
    %v1989 = vpop.f32.mrf.mxu0
    %v1990 = vpop.f32.mrf.mxu0
    %v1991 = vpop.f32.mrf.mxu0
    %1992 = vdwg.mxu0
    %v1993 = vmul.f32 %v1988, %v1988
    %vm1994 = vcmask 1041408
    %v1995 = vsel %vm1994, %v1993, 0.0
    %1996 = vadd.xlane.f32.xlu0 %v1995
    %v1997 = vpop.xlane.xlu0 %1996
    %v1998 = vmax.f32 %v1997, 1e-12
    %v1999 = vmul.f32 %v1767, %v1767
    %vm2000 = vcmask 1043458
    %v2001 = vsel %vm2000, %v1999, 0.0
    %2002 = vadd.xlane.f32.xlu0 %v2001
    %v2003 = vpop.xlane.xlu0 %2002
    %v2004 = vmax.f32 %v2003, 1e-12
    %v2006 = vrot.slane %v1767, 2
    %v2008 = vmul.f32 %v1988, %v2006
    %v2009 = vsel %vm1994, %v2008, 0.0
    %2010 = vadd.xlane.f32.xlu0 %v2009
    %v2011 = vpop.xlane.xlu0 %2010
    %v2012 = vrsqrt.pop %v1998
    %v2013 = vmul.f32 %v2011, %v2012
    %v2014 = vrsqrt.pop %v2004
    %v2016 = vrot.slane %v2014, 2
    %v2018 = vmul.f32 %v2013, %v2016
    %v2019 = vmul.f32 %v2018, 2.0
    %v2020 = vsub.f32 2.0, %v2019
    %vm2021 = vcmask 1024
    %v2022 = vsel %vm2021, %v2020, 0.0
    %2023 = vadd.xlane.f32.xlu0 %v2022
    %v2024 = vpop.xlane.xlu0 %2023
    %v2025 = vrot.slane %v2024, 4
    %v2026 = vadd.f32 %v2024, %v2025
    %v2027 = vrot.slane %v2026, 2
    %v2028 = vadd.f32 %v2026, %v2027
    %v2029 = vrot.slane %v2028, 1
    %v2030 = vadd.f32 %v2028, %v2029
    %s2031 = vtos %v2030
    %v2032 = vrcp.pop 2.0
    %s2033 = vtos %v2032
    %s2034 = smul.f32 %s2031, %s2033
    %v2035 = vsel %vm2000, %v1993, 0.0
    %2036 = vadd.xlane.f32.xlu0 %v2035
    %v2037 = vpop.xlane.xlu0 %2036
    %v2038 = vmax.f32 %v2037, 1e-12
    %v2039 = vsel %vm1994, %v1999, 0.0
    %2040 = vadd.xlane.f32.xlu0 %v2039
    %v2041 = vpop.xlane.xlu0 %2040
    %v2042 = vmax.f32 %v2041, 1e-12
    %v2043 = vrot.slane %v1767, 6
    %v2045 = vmul.f32 %v1988, %v2043
    %v2046 = vsel %vm2000, %v2045, 0.0
    %2047 = vadd.xlane.f32.xlu0 %v2046
    %v2048 = vpop.xlane.xlu0 %2047
    %v2049 = vrsqrt.pop %v2038
    %v2050 = vmul.f32 %v2048, %v2049
    %v2051 = vrsqrt.pop %v2042
    %v2053 = vrot.slane %v2051, 6
    %v2055 = vmul.f32 %v2050, %v2053
    %v2056 = vmul.f32 %v2055, 2.0
    %v2057 = vsub.f32 2.0, %v2056
    %v2059 = vrot.slane %v2057, 2
    %v2061 = vsel %vm2021, %v2059, 0.0
    %2062 = vadd.xlane.f32.xlu0 %v2061
    %v2063 = vpop.xlane.xlu0 %2062
    %v2064 = vrot.slane %v2063, 4
    %v2065 = vadd.f32 %v2063, %v2064
    %v2066 = vrot.slane %v2065, 2
    %v2067 = vadd.f32 %v2065, %v2066
    %v2068 = vrot.slane %v2067, 1
    %v2069 = vadd.f32 %v2067, %v2068
    %s2070 = vtos %v2069
    %v2071 = vrcp.pop 2.0
    %s2072 = vtos %v2071
    %s2073 = smul.f32 %s2070, %s2072
    %s2074 = sadd.f32 %s2034, %s2073
    %s2075 = smul.f32 %s2074, 0.5
    %v2076 = vstv %s2075
    %vm2077 = vcmask 0
    %2078 = vst.msk [vmem:[#allocation2] sm:$0x1] %vm2077, %v2076
    // Predicated region
    $region26: #{ssmodel_forward.1} parent=1 // pred_check
      _
    $region27: #{ssmodel_forward.1} parent=1 // pred_check_branch
      %2080 = sbr.rel (0) target = $region29
    $region28: #{ssmodel_forward.1} parent=1 // pred_region
      %s2082 = ssub.s32 16, 16
      %2083 = vsyncadd [#allocation3], %s2082
      %s2085 = sshll.u32 [#allocation2], 4
      %s2086 = int_to_ptr.vmem [resolvable:$true] %s2085
      %2088 = dma.vmem_to_hbm [thread:$0]  %s2086, 16, %s6, [#allocation3]
    $region29: #{ssmodel_forward.1} parent=1 // pred_fallthru
      _
    // Predicated region
    $region30: #{ssmodel_forward.1} parent=1 // pred_check
      _
    $region31: #{ssmodel_forward.1} parent=1 // pred_check_branch
      %2090 = sbr.rel (0) target = $region33
    $region32: #{ssmodel_forward.1} parent=1 // pred_region
      %2091 = dma.done [#allocation3], 16
    $region33: #{ssmodel_forward.1} parent=1 // pred_fallthru
      _
    %2092 = vsyncpa [#allocation3], 1

</llo_original>
